<compile_context>
chip_gen: v5e
topology: v5e:2x2
jax: 0.10.0
libtpu: 0.0.40
codegen_flags: <defaults>
</compile_context>

<pallas_src>
import functools

import jax
import jax.numpy as jnp
from jax.experimental import pallas as pl
from jax.experimental.pallas import tpu as pltpu


def _round_up(v, m):
    return -(-v // m) * m


# ----------------------------------------------------------------------------
# Pallas kernel: fused multi-layer MLP (Linear [+ReLU]) on one batch tile
# ----------------------------------------------------------------------------

def _fused_mlp_kernel(*refs, num_layers):
    """refs = (x_ref, w1, b1, w2, b2, ..., wL, bL, o_ref).

    x_ref : (tm, D0)    bf16 batch tile (D0 = true input dim, unpadded)
    wi    : (Kip, Nip)  bf16 weight (VMEM-resident across the batch grid)
    bi    : (1,  Nip)   f32 bias
    o_ref : (tm, NLp)   f32 output tile (lane-dense, 128-multiple)
    """
    x_ref = refs[0]
    o_ref = refs[-1]

    h = x_ref[...]                                   # bf16
    for li in range(num_layers):
        w_ref = refs[1 + 2 * li]
        b_ref = refs[2 + 2 * li]
        acc = jnp.dot(h, w_ref[...], preferred_element_type=jnp.float32)
        acc = acc + b_ref[...]                       # f32 bias epilogue
        if li < num_layers - 1:
            # ReLU commutes with the bf16 downcast -> run it on packed bf16
            # vregs (free-ish on v6e/v7x); inter-layer activations stay bf16.
            h = jnp.maximum(acc.astype(jnp.bfloat16), 0.0)
        else:
            o_ref[...] = acc.astype(o_ref.dtype)     # final Linear: no ReLU


# ----------------------------------------------------------------------------
# Parameters (deterministic synthetic init, PyTorch nn.Linear-style ranges)
# ----------------------------------------------------------------------------

def init_params(key, input_dim, output_dim=256, hidden_dims=None):
    if hidden_dims is None:
        hidden_dims = [256, 512, 256]
    dims = [input_dim] + list(hidden_dims) + [output_dim]

    layers = []
    keys = jax.random.split(key, len(dims) - 1)
    for li, (k, (din, dout)) in enumerate(zip(keys, zip(dims[:-1], dims[1:]))):
        kw, kb = jax.random.split(k)
        bound = (1.0 / din) ** 0.5                   # torch default U(-1/sqrt(fan_in), .)
        w = jax.random.uniform(kw, (din, dout), jnp.float32, -bound, bound)
        b = jax.random.uniform(kb, (dout,), jnp.float32, -bound, bound)
        # Lane (output) dim padded to 128 multiples for lane-dense MXU output /
        # unmasked stores. Sublane (input) dim is NOT padded for layer 0
        # (block == full array dim bypasses the (8,128) rule); for later layers
        # it is padded to match the previous layer's padded output — those zero
        # rows multiply zero-valued padded activations, so math is unchanged.
        din_p = din if li == 0 else _round_up(din, 128)
        dout_p = _round_up(dout, 128)
        w_p = jnp.pad(w, ((0, din_p - din), (0, dout_p - dout))).astype(jnp.bfloat16)
        b_p = jnp.pad(b, (0, dout_p - dout)).reshape(1, dout_p).astype(jnp.float32)
        layers.append((w_p, b_p))

    return {"layers": layers, "dims": dims,
            "input_dim": input_dim, "output_dim": output_dim}


# ----------------------------------------------------------------------------
# Forward pass
# ----------------------------------------------------------------------------

def custom_data_encoder_forward(x, params, *, tm=512):
    """x: (batch, input_dim) float32 -> (batch, output_dim) float32."""
    layers = params["layers"]
    num_layers = len(layers)
    out_dim = params["output_dim"]

    B, D = x.shape
    N_last_p = layers[-1][0].shape[1]

    # ---- batch tiling: 16-row alignment (bf16 sublane packing) -------------
    tm = max(16, (int(tm) // 16) * 16)               # guard caller-supplied tm
    Mp0 = _round_up(max(B, 16), 16)
    tm_eff = min(tm, Mp0)
    if Mp0 >= 32:
        # v7x megacore: keep >= 2 batch tiles so the "parallel" grid axis can
        # be sharded across both TensorCores.
        half = _round_up(-(-Mp0 // 2), 16)
        tm_eff = min(tm_eff, max(half, 16))
    tm_eff = max(16, (tm_eff // 16) * 16)
    Mp = _round_up(Mp0, tm_eff)

    # ---- input: bf16 cast + row padding only (no feature-dim padding) ------
    x_b = x.astype(jnp.bfloat16)
    x_p = x_b if Mp == B else jnp.pad(x_b, ((0, Mp - B), (0, 0)))

    # ---- inputs -------------------------------------------------------------
    args = [x_p]
    for (w_p, b_p) in layers:
        args.append(w_p)
        args.append(b_p)

    # ---- VMEM budget: real footprint + ~25% headroom ------------------------
    w_bytes = sum(w.size * 2 + b.size * 4 for (w, b) in layers)  # 1 buffer each
    max_np = max(N_last_p, max(w.shape[1] for (w, _) in layers))
    vmem_bytes = (2 * tm_eff * D * 2                 # x tile (bf16, 2 buffers)
                  + 2 * tm_eff * N_last_p * 4        # out tile (f32, 2 buffers)
                  + w_bytes                          # resident weights/biases
                  + 3 * tm_eff * max_np * 4)         # in-kernel activations
    vmem_limit = min(max(int(vmem_bytes * 1.25), 4 * 1024 * 1024),
                     48 * 1024 * 1024)               # well inside v7x 64 MiB

    def _build_specs(single_buffer_weights):
        in_specs = [pl.BlockSpec((tm_eff, D), lambda i: (i, 0))]
        wb_kwargs = ({"pipeline_mode": pl.Buffered(1)}
                     if single_buffer_weights else {})
        for (w_p, b_p) in layers:
            kp, np_ = w_p.shape
            in_specs.append(pl.BlockSpec((kp, np_), lambda i: (0, 0), **wb_kwargs))
            in_specs.append(pl.BlockSpec((1, np_), lambda i: (0, 0), **wb_kwargs))
        return in_specs

    def _run(single_buffer_weights):
        return pl.pallas_call(
            functools.partial(_fused_mlp_kernel, num_layers=num_layers),
            out_shape=jax.ShapeDtypeStruct((Mp, N_last_p), jnp.float32),
            grid=(Mp // tm_eff,),
            in_specs=_build_specs(single_buffer_weights),
            out_specs=pl.BlockSpec((tm_eff, N_last_p), lambda i: (i, 0)),
            compiler_params=pltpu.CompilerParams(
                dimension_semantics=("parallel",),
                vmem_limit_bytes=vmem_limit,
            ),
        )(*args)

    try:
        out = _run(True)          # single-buffered resident weights (constant index_map)
    except Exception:
        out = _run(False)         # fallback if this jax rejects pipeline_mode here

    return out[:B, :out_dim]


# pure-JAX reference mirroring the kernel's bf16 activation math
def _reference_forward(x, params):
    dims = params["dims"]
    layers = params["layers"]
    h = x.astype(jnp.bfloat16).astype(jnp.float32)
    for li, (w_p, b_p) in enumerate(layers):
        din, dout = dims[li], dims[li + 1]
        w = w_p[:din, :dout].astype(jnp.float32)
        b = b_p[0, :dout]
        h = h @ w + b
        if li < len(layers) - 1:
            h = jnp.maximum(h, 0.0).astype(jnp.bfloat16).astype(jnp.float32)
    return h


if __name__ == "__main__":
    key = jax.random.PRNGKey(0)
    pkey, xkey = jax.random.split(key)

    input_dim, output_dim = 32, 256                  # hidden_dims default [256, 512, 256]
    params = init_params(pkey, input_dim=input_dim, output_dim=output_dim)

    x = jax.random.normal(xkey, (2, input_dim), jnp.float32)

    out = custom_data_encoder_forward(x, params)
    out = jax.block_until_ready(out)

    assert out.shape == (2, output_dim), out.shape
    assert bool(jnp.all(jnp.isfinite(out)))

    ref = _reference_forward(x, params)
    max_err = float(jnp.max(jnp.abs(out - ref)))
    assert max_err < 5e-2, f"max abs err {max_err}"  # bf16-MXU rounding tolerance

    print("KERNEL_OK")
</pallas_src>

<mosaic_0001>
module attributes {stable_mosaic.version = 11 : i64} {
  func.func @_fused_mlp_kernel(%arg0: i32, %arg1: memref<16x32xbf16, #tpu.memory_space<vmem>>, %arg2: memref<32x256xbf16, #tpu.memory_space<vmem>>, %arg3: memref<1x256xf32, #tpu.memory_space<vmem>>, %arg4: memref<256x512xbf16, #tpu.memory_space<vmem>>, %arg5: memref<1x512xf32, #tpu.memory_space<vmem>>, %arg6: memref<512x256xbf16, #tpu.memory_space<vmem>>, %arg7: memref<1x256xf32, #tpu.memory_space<vmem>>, %arg8: memref<256x256xbf16, #tpu.memory_space<vmem>>, %arg9: memref<1x256xf32, #tpu.memory_space<vmem>>, %arg10: memref<16x256xf32, #tpu.memory_space<vmem>>) attributes {dimension_semantics = [#tpu.dimension_semantics<parallel>], iteration_bounds = array<i64: 1>, scalar_prefetch = 0 : i64, scratch_operands = 0 : i64, tpu.core_type = #tpu.core_type<tc>, window_params = [{transform_indices = @transform_0, window_bounds = array<i64: 16, 32>}, {pipeline_mode = #tpu.pipeline_mode<synchronous>, transform_indices = @transform_1, window_bounds = array<i64: 32, 256>}, {pipeline_mode = #tpu.pipeline_mode<synchronous>, transform_indices = @transform_2, window_bounds = array<i64: 1, 256>}, {pipeline_mode = #tpu.pipeline_mode<synchronous>, transform_indices = @transform_3, window_bounds = array<i64: 256, 512>}, {pipeline_mode = #tpu.pipeline_mode<synchronous>, transform_indices = @transform_4, window_bounds = array<i64: 1, 512>}, {pipeline_mode = #tpu.pipeline_mode<synchronous>, transform_indices = @transform_5, window_bounds = array<i64: 512, 256>}, {pipeline_mode = #tpu.pipeline_mode<synchronous>, transform_indices = @transform_6, window_bounds = array<i64: 1, 256>}, {pipeline_mode = #tpu.pipeline_mode<synchronous>, transform_indices = @transform_7, window_bounds = array<i64: 256, 256>}, {pipeline_mode = #tpu.pipeline_mode<synchronous>, transform_indices = @transform_8, window_bounds = array<i64: 1, 256>}, {transform_indices = @transform_9, window_bounds = array<i64: 16, 256>}]} {
    %c0 = arith.constant 0 : index
    %c0_0 = arith.constant 0 : index
    %0 = vector.load %arg1[%c0, %c0_0] : memref<16x32xbf16, #tpu.memory_space<vmem>>, vector<16x32xbf16>
    %c0_1 = arith.constant 0 : index
    %c0_2 = arith.constant 0 : index
    %1 = vector.load %arg2[%c0_1, %c0_2] : memref<32x256xbf16, #tpu.memory_space<vmem>>, vector<32x256xbf16>
    %cst = arith.constant dense<0.000000e+00> : vector<16x256xf32>
    %2 = tpu.matmul %0, %1, %cst {dimension_numbers = #tpu.dot_dimension_numbers<[1], [0], [0], [1], [0, 0, 1, 1], [], []>} : vector<16x32xbf16>, vector<32x256xbf16>, vector<16x256xf32> -> vector<16x256xf32>
    %c0_3 = arith.constant 0 : index
    %c0_4 = arith.constant 0 : index
    %3 = vector.load %arg3[%c0_3, %c0_4] : memref<1x256xf32, #tpu.memory_space<vmem>>, vector<1x256xf32>
    %4 = vector.broadcast %3 : vector<1x256xf32> to vector<16x256xf32>
    %5 = arith.addf %2, %4 : vector<16x256xf32>
    %6 = arith.truncf %5 : vector<16x256xf32> to vector<16x256xbf16>
    %cst_5 = arith.constant 0.000000e+00 : bf16
    %7 = vector.broadcast %cst_5 : bf16 to vector<16x256xbf16>
    %8 = arith.maximumf %6, %7 : vector<16x256xbf16>
    %c0_6 = arith.constant 0 : index
    %c0_7 = arith.constant 0 : index
    %9 = vector.load %arg4[%c0_6, %c0_7] : memref<256x512xbf16, #tpu.memory_space<vmem>>, vector<256x512xbf16>
    %cst_8 = arith.constant dense<0.000000e+00> : vector<16x512xf32>
    %10 = tpu.matmul %8, %9, %cst_8 {dimension_numbers = #tpu.dot_dimension_numbers<[1], [0], [0], [1], [0, 0, 1, 1], [], []>} : vector<16x256xbf16>, vector<256x512xbf16>, vector<16x512xf32> -> vector<16x512xf32>
    %c0_9 = arith.constant 0 : index
    %c0_10 = arith.constant 0 : index
    %11 = vector.load %arg5[%c0_9, %c0_10] : memref<1x512xf32, #tpu.memory_space<vmem>>, vector<1x512xf32>
    %12 = vector.broadcast %11 : vector<1x512xf32> to vector<16x512xf32>
    %13 = arith.addf %10, %12 : vector<16x512xf32>
    %14 = arith.truncf %13 : vector<16x512xf32> to vector<16x512xbf16>
    %cst_11 = arith.constant 0.000000e+00 : bf16
    %15 = vector.broadcast %cst_11 : bf16 to vector<16x512xbf16>
    %16 = arith.maximumf %14, %15 : vector<16x512xbf16>
    %c0_12 = arith.constant 0 : index
    %c0_13 = arith.constant 0 : index
    %17 = vector.load %arg6[%c0_12, %c0_13] : memref<512x256xbf16, #tpu.memory_space<vmem>>, vector<512x256xbf16>
    %cst_14 = arith.constant dense<0.000000e+00> : vector<16x256xf32>
    %18 = tpu.matmul %16, %17, %cst_14 {dimension_numbers = #tpu.dot_dimension_numbers<[1], [0], [0], [1], [0, 0, 1, 1], [], []>} : vector<16x512xbf16>, vector<512x256xbf16>, vector<16x256xf32> -> vector<16x256xf32>
    %c0_15 = arith.constant 0 : index
    %c0_16 = arith.constant 0 : index
    %19 = vector.load %arg7[%c0_15, %c0_16] : memref<1x256xf32, #tpu.memory_space<vmem>>, vector<1x256xf32>
    %20 = vector.broadcast %19 : vector<1x256xf32> to vector<16x256xf32>
    %21 = arith.addf %18, %20 : vector<16x256xf32>
    %22 = arith.truncf %21 : vector<16x256xf32> to vector<16x256xbf16>
    %cst_17 = arith.constant 0.000000e+00 : bf16
    %23 = vector.broadcast %cst_17 : bf16 to vector<16x256xbf16>
    %24 = arith.maximumf %22, %23 : vector<16x256xbf16>
    %c0_18 = arith.constant 0 : index
    %c0_19 = arith.constant 0 : index
    %25 = vector.load %arg8[%c0_18, %c0_19] : memref<256x256xbf16, #tpu.memory_space<vmem>>, vector<256x256xbf16>
    %cst_20 = arith.constant dense<0.000000e+00> : vector<16x256xf32>
    %26 = tpu.matmul %24, %25, %cst_20 {dimension_numbers = #tpu.dot_dimension_numbers<[1], [0], [0], [1], [0, 0, 1, 1], [], []>} : vector<16x256xbf16>, vector<256x256xbf16>, vector<16x256xf32> -> vector<16x256xf32>
    %c0_21 = arith.constant 0 : index
    %c0_22 = arith.constant 0 : index
    %27 = vector.load %arg9[%c0_21, %c0_22] : memref<1x256xf32, #tpu.memory_space<vmem>>, vector<1x256xf32>
    %28 = vector.broadcast %27 : vector<1x256xf32> to vector<16x256xf32>
    %29 = arith.addf %26, %28 : vector<16x256xf32>
    %c0_23 = arith.constant 0 : index
    %c0_24 = arith.constant 0 : index
    %30 = vector.load %arg10[%c0_23, %c0_24] : memref<16x256xf32, #tpu.memory_space<vmem>>, vector<16x256xf32>
    tpu.vector_store %arg10[%c0_23, %c0_24], %29 {strides = array<i32>} : memref<16x256xf32, #tpu.memory_space<vmem>>, vector<16x256xf32>,
    return
  }
  func.func @transform_0(%arg0: i32) -> (i32, i32) {
    %c0_i32 = arith.constant 0 : i32
    %c0_i32_0 = arith.constant 0 : i32
    return %arg0, %c0_i32 : i32, i32
  }
  func.func @transform_1(%arg0: i32) -> (i32, i32) {
    %c0_i32 = arith.constant 0 : i32
    %c0_i32_0 = arith.constant 0 : i32
    %c0_i32_1 = arith.constant 0 : i32
    return %c0_i32, %c0_i32_0 : i32, i32
  }
  func.func @transform_2(%arg0: i32) -> (i32, i32) {
    %c0_i32 = arith.constant 0 : i32
    %c0_i32_0 = arith.constant 0 : i32
    %c0_i32_1 = arith.constant 0 : i32
    return %c0_i32, %c0_i32_0 : i32, i32
  }
  func.func @transform_3(%arg0: i32) -> (i32, i32) {
    %c0_i32 = arith.constant 0 : i32
    %c0_i32_0 = arith.constant 0 : i32
    %c0_i32_1 = arith.constant 0 : i32
    return %c0_i32, %c0_i32_0 : i32, i32
  }
  func.func @transform_4(%arg0: i32) -> (i32, i32) {
    %c0_i32 = arith.constant 0 : i32
    %c0_i32_0 = arith.constant 0 : i32
    %c0_i32_1 = arith.constant 0 : i32
    return %c0_i32, %c0_i32_0 : i32, i32
  }
  func.func @transform_5(%arg0: i32) -> (i32, i32) {
    %c0_i32 = arith.constant 0 : i32
    %c0_i32_0 = arith.constant 0 : i32
    %c0_i32_1 = arith.constant 0 : i32
    return %c0_i32, %c0_i32_0 : i32, i32
  }
  func.func @transform_6(%arg0: i32) -> (i32, i32) {
    %c0_i32 = arith.constant 0 : i32
    %c0_i32_0 = arith.constant 0 : i32
    %c0_i32_1 = arith.constant 0 : i32
    return %c0_i32, %c0_i32_0 : i32, i32
  }
  func.func @transform_7(%arg0: i32) -> (i32, i32) {
    %c0_i32 = arith.constant 0 : i32
    %c0_i32_0 = arith.constant 0 : i32
    %c0_i32_1 = arith.constant 0 : i32
    return %c0_i32, %c0_i32_0 : i32, i32
  }
  func.func @transform_8(%arg0: i32) -> (i32, i32) {
    %c0_i32 = arith.constant 0 : i32
    %c0_i32_0 = arith.constant 0 : i32
    %c0_i32_1 = arith.constant 0 : i32
    return %c0_i32, %c0_i32_0 : i32, i32
  }
  func.func @transform_9(%arg0: i32) -> (i32, i32) {
    %c0_i32 = arith.constant 0 : i32
    %c0_i32_0 = arith.constant 0 : i32
    return %arg0, %c0_i32 : i32, i32
  }
}

module attributes {stable_mosaic.version = 11 : i64} {
  func.func @_fused_mlp_kernel(%arg0: i32, %arg1: memref<16x32xbf16, #tpu.memory_space<vmem>>, %arg2: memref<32x256xbf16, #tpu.memory_space<vmem>>, %arg3: memref<1x256xf32, #tpu.memory_space<vmem>>, %arg4: memref<256x512xbf16, #tpu.memory_space<vmem>>, %arg5: memref<1x512xf32, #tpu.memory_space<vmem>>, %arg6: memref<512x256xbf16, #tpu.memory_space<vmem>>, %arg7: memref<1x256xf32, #tpu.memory_space<vmem>>, %arg8: memref<256x256xbf16, #tpu.memory_space<vmem>>, %arg9: memref<1x256xf32, #tpu.memory_space<vmem>>, %arg10: memref<16x256xf32, #tpu.memory_space<vmem>>) attributes {dimension_semantics = [#tpu.dimension_semantics<parallel>], iteration_bounds = array<i64: 1>, scalar_prefetch = 0 : i64, scratch_operands = 0 : i64, tpu.core_type = #tpu.core_type<tc>, window_params = [{transform_indices = @transform_0, window_bounds = array<i64: 16, 32>}, {pipeline_mode = #tpu.pipeline_mode<synchronous>, transform_indices = @transform_1, window_bounds = array<i64: 32, 256>}, {pipeline_mode = #tpu.pipeline_mode<synchronous>, transform_indices = @transform_2, window_bounds = array<i64: 1, 256>}, {pipeline_mode = #tpu.pipeline_mode<synchronous>, transform_indices = @transform_3, window_bounds = array<i64: 256, 512>}, {pipeline_mode = #tpu.pipeline_mode<synchronous>, transform_indices = @transform_4, window_bounds = array<i64: 1, 512>}, {pipeline_mode = #tpu.pipeline_mode<synchronous>, transform_indices = @transform_5, window_bounds = array<i64: 512, 256>}, {pipeline_mode = #tpu.pipeline_mode<synchronous>, transform_indices = @transform_6, window_bounds = array<i64: 1, 256>}, {pipeline_mode = #tpu.pipeline_mode<synchronous>, transform_indices = @transform_7, window_bounds = array<i64: 256, 256>}, {pipeline_mode = #tpu.pipeline_mode<synchronous>, transform_indices = @transform_8, window_bounds = array<i64: 1, 256>}, {transform_indices = @transform_9, window_bounds = array<i64: 16, 256>}]} {
    %c0 = arith.constant 0 : index
    %c0_0 = arith.constant 0 : index
    %0 = vector.load %arg1[%c0, %c0_0] : memref<16x32xbf16, #tpu.memory_space<vmem>>, vector<16x32xbf16>
    %c0_1 = arith.constant 0 : index
    %c0_2 = arith.constant 0 : index
    %1 = vector.load %arg2[%c0_1, %c0_2] : memref<32x256xbf16, #tpu.memory_space<vmem>>, vector<32x256xbf16>
    %cst = arith.constant dense<0.000000e+00> : vector<16x256xf32>
    %2 = tpu.matmul %0, %1, %cst {dimension_numbers = #tpu.dot_dimension_numbers<[1], [0], [0], [1], [0, 0, 1, 1], [], []>} : vector<16x32xbf16>, vector<32x256xbf16>, vector<16x256xf32> -> vector<16x256xf32>
    %c0_3 = arith.constant 0 : index
    %c0_4 = arith.constant 0 : index
    %3 = vector.load %arg3[%c0_3, %c0_4] : memref<1x256xf32, #tpu.memory_space<vmem>>, vector<1x256xf32>
    %4 = vector.broadcast %3 : vector<1x256xf32> to vector<16x256xf32>
    %5 = arith.addf %2, %4 : vector<16x256xf32>
    %6 = arith.truncf %5 : vector<16x256xf32> to vector<16x256xbf16>
    %cst_5 = arith.constant 0.000000e+00 : bf16
    %7 = vector.broadcast %cst_5 : bf16 to vector<16x256xbf16>
    %8 = arith.maximumf %6, %7 : vector<16x256xbf16>
    %c0_6 = arith.constant 0 : index
    %c0_7 = arith.constant 0 : index
    %9 = vector.load %arg4[%c0_6, %c0_7] : memref<256x512xbf16, #tpu.memory_space<vmem>>, vector<256x512xbf16>
    %cst_8 = arith.constant dense<0.000000e+00> : vector<16x512xf32>
    %10 = tpu.matmul %8, %9, %cst_8 {dimension_numbers = #tpu.dot_dimension_numbers<[1], [0], [0], [1], [0, 0, 1, 1], [], []>} : vector<16x256xbf16>, vector<256x512xbf16>, vector<16x512xf32> -> vector<16x512xf32>
    %c0_9 = arith.constant 0 : index
    %c0_10 = arith.constant 0 : index
    %11 = vector.load %arg5[%c0_9, %c0_10] : memref<1x512xf32, #tpu.memory_space<vmem>>, vector<1x512xf32>
    %12 = vector.broadcast %11 : vector<1x512xf32> to vector<16x512xf32>
    %13 = arith.addf %10, %12 : vector<16x512xf32>
    %14 = arith.truncf %13 : vector<16x512xf32> to vector<16x512xbf16>
    %cst_11 = arith.constant 0.000000e+00 : bf16
    %15 = vector.broadcast %cst_11 : bf16 to vector<16x512xbf16>
    %16 = arith.maximumf %14, %15 : vector<16x512xbf16>
    %c0_12 = arith.constant 0 : index
    %c0_13 = arith.constant 0 : index
    %17 = vector.load %arg6[%c0_12, %c0_13] : memref<512x256xbf16, #tpu.memory_space<vmem>>, vector<512x256xbf16>
    %cst_14 = arith.constant dense<0.000000e+00> : vector<16x256xf32>
    %18 = tpu.matmul %16, %17, %cst_14 {dimension_numbers = #tpu.dot_dimension_numbers<[1], [0], [0], [1], [0, 0, 1, 1], [], []>} : vector<16x512xbf16>, vector<512x256xbf16>, vector<16x256xf32> -> vector<16x256xf32>
    %c0_15 = arith.constant 0 : index
    %c0_16 = arith.constant 0 : index
    %19 = vector.load %arg7[%c0_15, %c0_16] : memref<1x256xf32, #tpu.memory_space<vmem>>, vector<1x256xf32>
    %20 = vector.broadcast %19 : vector<1x256xf32> to vector<16x256xf32>
    %21 = arith.addf %18, %20 : vector<16x256xf32>
    %22 = arith.truncf %21 : vector<16x256xf32> to vector<16x256xbf16>
    %cst_17 = arith.constant 0.000000e+00 : bf16
    %23 = vector.broadcast %cst_17 : bf16 to vector<16x256xbf16>
    %24 = arith.maximumf %22, %23 : vector<16x256xbf16>
    %c0_18 = arith.constant 0 : index
    %c0_19 = arith.constant 0 : index
    %25 = vector.load %arg8[%c0_18, %c0_19] : memref<256x256xbf16, #tpu.memory_space<vmem>>, vector<256x256xbf16>
    %cst_20 = arith.constant dense<0.000000e+00> : vector<16x256xf32>
    %26 = tpu.matmul %24, %25, %cst_20 {dimension_numbers = #tpu.dot_dimension_numbers<[1], [0], [0], [1], [0, 0, 1, 1], [], []>} : vector<16x256xbf16>, vector<256x256xbf16>, vector<16x256xf32> -> vector<16x256xf32>
    %c0_21 = arith.constant 0 : index
    %c0_22 = arith.constant 0 : index
    %27 = vector.load %arg9[%c0_21, %c0_22] : memref<1x256xf32, #tpu.memory_space<vmem>>, vector<1x256xf32>
    %28 = vector.broadcast %27 : vector<1x256xf32> to vector<16x256xf32>
    %29 = arith.addf %26, %28 : vector<16x256xf32>
    %c0_23 = arith.constant 0 : index
    %c0_24 = arith.constant 0 : index
    %30 = vector.load %arg10[%c0_23, %c0_24] : memref<16x256xf32, #tpu.memory_space<vmem>>, vector<16x256xf32>
    tpu.vector_store %arg10[%c0_23, %c0_24], %29 {strides = array<i32>} : memref<16x256xf32, #tpu.memory_space<vmem>>, vector<16x256xf32>,
    return
  }
  func.func @transform_0(%arg0: i32) -> (i32, i32) {
    %c0_i32 = arith.constant 0 : i32
    %c0_i32_0 = arith.constant 0 : i32
    return %arg0, %c0_i32 : i32, i32
  }
  func.func @transform_1(%arg0: i32) -> (i32, i32) {
    %c0_i32 = arith.constant 0 : i32
    %c0_i32_0 = arith.constant 0 : i32
    %c0_i32_1 = arith.constant 0 : i32
    return %c0_i32, %c0_i32_0 : i32, i32
  }
  func.func @transform_2(%arg0: i32) -> (i32, i32) {
    %c0_i32 = arith.constant 0 : i32
    %c0_i32_0 = arith.constant 0 : i32
    %c0_i32_1 = arith.constant 0 : i32
    return %c0_i32, %c0_i32_0 : i32, i32
  }
  func.func @transform_3(%arg0: i32) -> (i32, i32) {
    %c0_i32 = arith.constant 0 : i32
    %c0_i32_0 = arith.constant 0 : i32
    %c0_i32_1 = arith.constant 0 : i32
    return %c0_i32, %c0_i32_0 : i32, i32
  }
  func.func @transform_4(%arg0: i32) -> (i32, i32) {
    %c0_i32 = arith.constant 0 : i32
    %c0_i32_0 = arith.constant 0 : i32
    %c0_i32_1 = arith.constant 0 : i32
    return %c0_i32, %c0_i32_0 : i32, i32
  }
  func.func @transform_5(%arg0: i32) -> (i32, i32) {
    %c0_i32 = arith.constant 0 : i32
    %c0_i32_0 = arith.constant 0 : i32
    %c0_i32_1 = arith.constant 0 : i32
    return %c0_i32, %c0_i32_0 : i32, i32
  }
  func.func @transform_6(%arg0: i32) -> (i32, i32) {
    %c0_i32 = arith.constant 0 : i32
    %c0_i32_0 = arith.constant 0 : i32
    %c0_i32_1 = arith.constant 0 : i32
    return %c0_i32, %c0_i32_0 : i32, i32
  }
  func.func @transform_7(%arg0: i32) -> (i32, i32) {
    %c0_i32 = arith.constant 0 : i32
    %c0_i32_0 = arith.constant 0 : i32
    %c0_i32_1 = arith.constant 0 : i32
    return %c0_i32, %c0_i32_0 : i32, i32
  }
  func.func @transform_8(%arg0: i32) -> (i32, i32) {
    %c0_i32 = arith.constant 0 : i32
    %c0_i32_0 = arith.constant 0 : i32
    %c0_i32_1 = arith.constant 0 : i32
    return %c0_i32, %c0_i32_0 : i32, i32
  }
  func.func @transform_9(%arg0: i32) -> (i32, i32) {
    %c0_i32 = arith.constant 0 : i32
    %c0_i32_0 = arith.constant 0 : i32
    return %arg0, %c0_i32 : i32, i32
  }
}

</mosaic_0001>

<llo_original>
// kernel: tpu_custom_call.1
$region0: #{tpu_custom_call.1}
  #allocation0 [shape = 'u32[]', space=smem, size = 0x4, offset = 0x4, fixed_abs, tag = 'smem constant byte address 0x4 - core index']
  #allocation1 [shape = 'u32[72,128]{1,0:T(1,128)}', space=vmem, size = 0x9000, scoped, tag = 'internal scratch']
  %s0 = inlined_call_operand.hbm [shape: bf16[16,32], index: 0, kind: input, shape index: {}]
  %s1 = inlined_call_operand.hbm [shape: bf16[32,256], index: 1, kind: input, shape index: {}]
  %s2 = inlined_call_operand.hbm [shape: f32[1,256], index: 2, kind: input, shape index: {}]
  %s3 = inlined_call_operand.hbm [shape: bf16[256,512], index: 3, kind: input, shape index: {}]
  %s4 = inlined_call_operand.hbm [shape: f32[1,512], index: 4, kind: input, shape index: {}]
  %s5 = inlined_call_operand.hbm [shape: bf16[512,256], index: 5, kind: input, shape index: {}]
  %s6 = inlined_call_operand.vmem [shape: f32[1,256], index: 6, kind: input, shape index: {}]
  %s7 = inlined_call_operand.hbm [shape: bf16[256,256], index: 7, kind: input, shape index: {}]
  %s8 = inlined_call_operand.vmem [shape: f32[1,256], index: 8, kind: input, shape index: {}]
  %s9 = inlined_call_operand.hbm [shape: f32[16,256], index: 9, kind: output, shape index: {}]
  %s10 = sld [smem:[#allocation0]]
  $region74: #{tpu_custom_call.1} parent=0
    _
  %s12 = ssub.s32 1, %s10
  %s13 = scalar_select 0, %s12, %s10
  $region1: #{tpu_custom_call.1} parent=0
    #allocation2 [shape = 'u8[4096]{0}', space=vmem, size = 0x1000, scoped, tag = 'input window, operand 0, single buffered']
    #allocation3 [shape = 's32[1]{0}', space=sflag, size = 0x4, scoped, tag = 'scoped memory for tpu_custom_call.1']
    #allocation4 [shape = 's32[1]{0}', space=sflag, size = 0x4, scoped, tag = 'scoped memory for tpu_custom_call.1']
    #allocation5 [shape = 'u8[16384]{0}', space=vmem, size = 0x4000, scoped, tag = 'input window, operand 1, single buffered']
    #allocation6 [shape = 's32[1]{0}', space=sflag, size = 0x4, scoped, tag = 'scoped memory for tpu_custom_call.1']
    #allocation7 [shape = 'u8[1024]{0}', space=vmem, size = 0x400, scoped, tag = 'input window, operand 2, single buffered']
    #allocation8 [shape = 'u8[262144]{0}', space=vmem, size = 0x40000, scoped, tag = 'input window, operand 3, single buffered']
    #allocation9 [shape = 's32[1]{0}', space=sflag, size = 0x4, scoped, tag = 'scoped memory for tpu_custom_call.1']
    #allocation10 [shape = 'u8[2048]{0}', space=vmem, size = 0x800, scoped, tag = 'input window, operand 4, single buffered']
    #allocation11 [shape = 'u8[262144]{0}', space=vmem, size = 0x40000, scoped, tag = 'input window, operand 5, single buffered']
    #allocation12 [shape = 's32[1]{0}', space=sflag, size = 0x4, scoped, tag = 'scoped memory for tpu_custom_call.1']
    #allocation13 [shape = 'u8[131072]{0}', space=vmem, size = 0x20000, scoped, tag = 'input window, operand 7, single buffered']
    #allocation14 [shape = 'u8[16384]{0}', space=vmem, size = 0x4000, scoped, tag = 'output window, operand 0, single buffered']
    %14 = vsyncpa [#allocation3], 0
    %15 = vsyncpa [#allocation6], 0
    %16 = vsyncpa [#allocation9], 0
    %17 = vsyncpa [#allocation12], 0
    %18 = vsyncpa [#allocation4], 0
    // Predicated region
    $region2: #{tpu_custom_call.1} parent=1 // pred_check
      _
    $region3: #{tpu_custom_call.1} parent=1 // pred_check_branch
      %20 = sbr.rel (0) target = $region5
    $region4: #{tpu_custom_call.1} parent=1 // pred_region
      %22 = vsyncadd [#allocation3], 0
      %s23 = sshll.u32 %s0, 4
      %s24 = int_to_ptr.hbm [resolvable:$true] %s23
      %s25 = sshll.u32 [#allocation2], 4
      %s26 = int_to_ptr.vmem [resolvable:$true] %s25
      %31 = dma.hbm_to_vmem [thread:$0]  %s24, 128, %s26, [#allocation3], 64, 64, 4
    $region5: #{tpu_custom_call.1} parent=1 // pred_fallthru
      _
    // Predicated region
    $region6: #{tpu_custom_call.1} parent=1 // pred_check
      _
    $region7: #{tpu_custom_call.1} parent=1 // pred_check_branch
      %33 = sbr.rel (0) target = $region9
    $region8: #{tpu_custom_call.1} parent=1 // pred_region
      %35 = vsyncadd [#allocation6], 0
      %s36 = sshll.u32 %s1, 4
      %s37 = int_to_ptr.hbm [resolvable:$true] %s36
      %s38 = sshll.u32 [#allocation5], 4
      %s39 = int_to_ptr.vmem [resolvable:$true] %s38
      %44 = dma.hbm_to_vmem [thread:$0]  %s37, 512, %s39, [#allocation6], 128, 128, 8
    $region9: #{tpu_custom_call.1} parent=1 // pred_fallthru
      _
    // Predicated region
    $region10: #{tpu_custom_call.1} parent=1 // pred_check
      _
    $region11: #{tpu_custom_call.1} parent=1 // pred_check_branch
      %46 = sbr.rel (0) target = $region13
    $region12: #{tpu_custom_call.1} parent=1 // pred_region
      %48 = vsyncadd [#allocation6], 0
      %s50 = sshll.u32 %s2, 4
      %s51 = int_to_ptr.hbm [resolvable:$true] %s50
      %s52 = sshll.u32 [#allocation7], 4
      %s53 = int_to_ptr.vmem [resolvable:$true] %s52
      %55 = dma.hbm_to_vmem [thread:$0]  %s51, 32, %s53, [#allocation6]
    $region13: #{tpu_custom_call.1} parent=1 // pred_fallthru
      _
    // Predicated region
    $region14: #{tpu_custom_call.1} parent=1 // pred_check
      _
    $region15: #{tpu_custom_call.1} parent=1 // pred_check_branch
      %57 = sbr.rel (0) target = $region17
    $region16: #{tpu_custom_call.1} parent=1 // pred_region
      %59 = vsyncadd [#allocation9], 0
      %s60 = sshll.u32 %s3, 4
      %s61 = int_to_ptr.hbm [resolvable:$true] %s60
      %s62 = sshll.u32 [#allocation8], 4
      %s63 = int_to_ptr.vmem [resolvable:$true] %s62
      %68 = dma.hbm_to_vmem [thread:$0]  %s61, 8192, %s63, [#allocation9], 256, 256, 16
    $region17: #{tpu_custom_call.1} parent=1 // pred_fallthru
      _
    // Predicated region
    $region18: #{tpu_custom_call.1} parent=1 // pred_check
      _
    $region19: #{tpu_custom_call.1} parent=1 // pred_check_branch
      %70 = sbr.rel (0) target = $region21
    $region20: #{tpu_custom_call.1} parent=1 // pred_region
      %72 = vsyncadd [#allocation9], 0
      %s74 = sshll.u32 %s4, 4
      %s75 = int_to_ptr.hbm [resolvable:$true] %s74
      %s76 = sshll.u32 [#allocation10], 4
      %s77 = int_to_ptr.vmem [resolvable:$true] %s76
      %79 = dma.hbm_to_vmem [thread:$0]  %s75, 64, %s77, [#allocation9]
    $region21: #{tpu_custom_call.1} parent=1 // pred_fallthru
      _
    // Predicated region
    $region22: #{tpu_custom_call.1} parent=1 // pred_check
      _
    $region23: #{tpu_custom_call.1} parent=1 // pred_check_branch
      %81 = sbr.rel (0) target = $region25
    $region24: #{tpu_custom_call.1} parent=1 // pred_region
      %83 = vsyncadd [#allocation12], 0
      %s84 = sshll.u32 %s5, 4
      %s85 = int_to_ptr.hbm [resolvable:$true] %s84
      %s86 = sshll.u32 [#allocation11], 4
      %s87 = int_to_ptr.vmem [resolvable:$true] %s86
      %92 = dma.hbm_to_vmem [thread:$0]  %s85, 8192, %s87, [#allocation12], 128, 128, 8
    $region25: #{tpu_custom_call.1} parent=1 // pred_fallthru
      _
    // Predicated region
    $region26: #{tpu_custom_call.1} parent=1 // pred_check
      _
    $region27: #{tpu_custom_call.1} parent=1 // pred_check_branch
      %94 = sbr.rel (0) target = $region29
    $region28: #{tpu_custom_call.1} parent=1 // pred_region
      _
    $region29: #{tpu_custom_call.1} parent=1 // pred_fallthru
      _
    // Predicated region
    $region30: #{tpu_custom_call.1} parent=1 // pred_check
      _
    $region31: #{tpu_custom_call.1} parent=1 // pred_check_branch
      %96 = sbr.rel (0) target = $region33
    $region32: #{tpu_custom_call.1} parent=1 // pred_region
      %98 = vsyncadd [#allocation12], 0
      %s99 = sshll.u32 %s7, 4
      %s100 = int_to_ptr.hbm [resolvable:$true] %s99
      %s101 = sshll.u32 [#allocation13], 4
      %s102 = int_to_ptr.vmem [resolvable:$true] %s101
      %107 = dma.hbm_to_vmem [thread:$0]  %s100, 4096, %s102, [#allocation12], 128, 128, 8
    $region33: #{tpu_custom_call.1} parent=1 // pred_fallthru
      _
    // Predicated region
    $region34: #{tpu_custom_call.1} parent=1 // pred_check
      _
    $region35: #{tpu_custom_call.1} parent=1 // pred_check_branch
      %109 = sbr.rel (0) target = $region37
    $region36: #{tpu_custom_call.1} parent=1 // pred_region
      _
    $region37: #{tpu_custom_call.1} parent=1 // pred_fallthru
      _
    // Predicated region
    $region38: #{tpu_custom_call.1} parent=1 // pred_check
      _
    $region39: #{tpu_custom_call.1} parent=1 // pred_check_branch
      %111 = sbr.rel (0) target = $region41
    $region40: #{tpu_custom_call.1} parent=1 // pred_region
      %113 = dma.done [#allocation3], 128
    $region41: #{tpu_custom_call.1} parent=1 // pred_fallthru
      _
    // Predicated region
    $region42: #{tpu_custom_call.1} parent=1 // pred_check
      _
    $region43: #{tpu_custom_call.1} parent=1 // pred_check_branch
      %115 = sbr.rel (0) target = $region45
    $region44: #{tpu_custom_call.1} parent=1 // pred_region
      %117 = dma.done [#allocation6], 512
    $region45: #{tpu_custom_call.1} parent=1 // pred_fallthru
      _
    // Predicated region
    $region46: #{tpu_custom_call.1} parent=1 // pred_check
      _
    $region47: #{tpu_custom_call.1} parent=1 // pred_check_branch
      %119 = sbr.rel (0) target = $region49
    $region48: #{tpu_custom_call.1} parent=1 // pred_region
      %121 = dma.done [#allocation6], 32
    $region49: #{tpu_custom_call.1} parent=1 // pred_fallthru
      _
    // Predicated region
    $region50: #{tpu_custom_call.1} parent=1 // pred_check
      _
    $region51: #{tpu_custom_call.1} parent=1 // pred_check_branch
      %123 = sbr.rel (0) target = $region53
    $region52: #{tpu_custom_call.1} parent=1 // pred_region
      %125 = dma.done [#allocation9], 8192
    $region53: #{tpu_custom_call.1} parent=1 // pred_fallthru
      _
    // Predicated region
    $region54: #{tpu_custom_call.1} parent=1 // pred_check
      _
    $region55: #{tpu_custom_call.1} parent=1 // pred_check_branch
      %127 = sbr.rel (0) target = $region57
    $region56: #{tpu_custom_call.1} parent=1 // pred_region
      %129 = dma.done [#allocation9], 64
    $region57: #{tpu_custom_call.1} parent=1 // pred_fallthru
      _
    // Predicated region
    $region58: #{tpu_custom_call.1} parent=1 // pred_check
      _
    $region59: #{tpu_custom_call.1} parent=1 // pred_check_branch
      %131 = sbr.rel (0) target = $region61
    $region60: #{tpu_custom_call.1} parent=1 // pred_region
      %133 = dma.done [#allocation12], 8192
    $region61: #{tpu_custom_call.1} parent=1 // pred_fallthru
      _
    // Predicated region
    $region62: #{tpu_custom_call.1} parent=1 // pred_check
      _
    $region63: #{tpu_custom_call.1} parent=1 // pred_check_branch
      %135 = sbr.rel (0) target = $region65
    $region64: #{tpu_custom_call.1} parent=1 // pred_region
      %137 = dma.done [#allocation12], 4096
    $region65: #{tpu_custom_call.1} parent=1 // pred_fallthru
      _
    %v139 = vld [vmem:[#allocation2] sm:$0xf]
    %v140 = vld [vmem:[#allocation2 + $0x4] sm:$0xf]
    %v141 = vld [vmem:[#allocation5] sm:$0xff]
    %v142 = vld [vmem:[#allocation5 + $0x8] sm:$0xff]
    %v143 = vld [vmem:[#allocation5 + $0x10] sm:$0xff]
    %v144 = vld [vmem:[#allocation5 + $0x18] sm:$0xff]
    %v145 = vld [vmem:[#allocation7] sm:$0x3]
    %v147 = vperm.slane %v145, 0
    %v148 = vperm.slane %v145, 1
    %v153 = vunpack.c.l.b16 %v139
    %v154 = vunpack.c.l.b16 %v140
    %v155 = vpack.c.b16 %v154, %v153
    %v160 = vunpack.c.l.b16 %v141
    %v161 = vunpack.c.h.b16 %v141
    %v162 = vunpack.c.l.b16 %v142
    %v163 = vunpack.c.h.b16 %v142
    %v164 = vunpack.c.l.b16 %v143
    %v165 = vunpack.c.h.b16 %v143
    %v166 = vunpack.c.l.b16 %v144
    %v167 = vunpack.c.h.b16 %v144
    %v168 = vpack.c.b16 %v162, %v160
    %v169 = vpack.c.b16 %v163, %v161
    %v170 = vpack.c.b16 %v166, %v164
    %v171 = vpack.c.b16 %v167, %v165
    %vm176 = vcmask 261120
    %v178 = vsel %vm176, %v155, 0
    %180 = vmatpush.bf16.msra.mxu0 0
    %181 = vmatpush.bf16.msra.mxu0 0
    %182 = vmatpush.bf16.msra.mxu0 0
    %183 = vmatpush.bf16.msra.mxu0 0
    %184 = vmatpush.bf16.msra.mxu0 0
    %185 = vmatpush.bf16.msra.mxu0 0
    %186 = vmatpush.bf16.msra.mxu0 %v170
    %187 = vmatpush.bf16.msra.mxu0 %v168
    %188 = vmatmul.bf16.gmra.mxu0 %v178
    %v189 = vpop.f32.mrf.mxu0
    %v190 = vadd.f32 %v147, %v189
    %v191 = vpop.f32.mrf.mxu0
    %v192 = vadd.f32 %v147, %v191
    %193 = vdwg.mxu0
    %194 = vmatpush.bf16.msra.mxu0 0
    %195 = vmatpush.bf16.msra.mxu0 0
    %196 = vmatpush.bf16.msra.mxu0 0
    %197 = vmatpush.bf16.msra.mxu0 0
    %198 = vmatpush.bf16.msra.mxu0 0
    %199 = vmatpush.bf16.msra.mxu0 0
    %200 = vmatpush.bf16.msra.mxu0 %v171
    %201 = vmatpush.bf16.msra.mxu0 %v169
    %202 = vmatmul.bf16.gmra.mxu0 %v178
    %v203 = vpop.f32.mrf.mxu0
    %v204 = vadd.f32 %v148, %v203
    %v205 = vpop.f32.mrf.mxu0
    %v206 = vadd.f32 %v148, %v205
    %207 = vdwg.mxu0
    %v208 = vpack.c.bf16 %v204, %v190
    %v209 = vpack.c.bf16 %v206, %v192
    %v210 = vunpack.c.l.bf16 %v208
    %v211 = vunpack.c.h.bf16 %v208
    %v212 = vunpack.c.l.bf16 %v209
    %v213 = vunpack.c.h.bf16 %v209
    %v214 = vmax.f32 %v210, 0.0
    %v215 = vmax.f32 %v211, 0.0
    %v216 = vmax.f32 %v212, 0.0
    %v217 = vmax.f32 %v213, 0.0
    %v218 = vpack.c.bf16 %v216, %v214
    %v219 = vpack.c.bf16 %v217, %v215
    %v220 = vld [vmem:[#allocation8] sm:$0xff]
    %v221 = vld [vmem:[#allocation8 + $0x8] sm:$0xff]
    %v222 = vld [vmem:[#allocation8 + $0x10] sm:$0xff]
    %v223 = vld [vmem:[#allocation8 + $0x18] sm:$0xff]
    %v224 = vld [vmem:[#allocation8 + $0x20] sm:$0xff]
    %v225 = vld [vmem:[#allocation8 + $0x28] sm:$0xff]
    %v226 = vld [vmem:[#allocation8 + $0x30] sm:$0xff]
    %v227 = vld [vmem:[#allocation8 + $0x38] sm:$0xff]
    %v228 = vld [vmem:[#allocation8 + $0x40] sm:$0xff]
    %v229 = vld [vmem:[#allocation8 + $0x48] sm:$0xff]
    %v230 = vld [vmem:[#allocation8 + $0x50] sm:$0xff]
    %v231 = vld [vmem:[#allocation8 + $0x58] sm:$0xff]
    %v232 = vld [vmem:[#allocation8 + $0x60] sm:$0xff]
    %v233 = vld [vmem:[#allocation8 + $0x68] sm:$0xff]
    %v234 = vld [vmem:[#allocation8 + $0x70] sm:$0xff]
    %v235 = vld [vmem:[#allocation8 + $0x78] sm:$0xff]
    %v236 = vld [vmem:[#allocation8 + $0x80] sm:$0xff]
    %v237 = vld [vmem:[#allocation8 + $0x88] sm:$0xff]
    %v238 = vld [vmem:[#allocation8 + $0x90] sm:$0xff]
    %v239 = vld [vmem:[#allocation8 + $0x98] sm:$0xff]
    %v240 = vld [vmem:[#allocation8 + $0xa0] sm:$0xff]
    %v241 = vld [vmem:[#allocation8 + $0xa8] sm:$0xff]
    %v242 = vld [vmem:[#allocation8 + $0xb0] sm:$0xff]
    %v243 = vld [vmem:[#allocation8 + $0xb8] sm:$0xff]
    %v244 = vld [vmem:[#allocation8 + $0xc0] sm:$0xff]
    %v245 = vld [vmem:[#allocation8 + $0xc8] sm:$0xff]
    %v246 = vld [vmem:[#allocation8 + $0xd0] sm:$0xff]
    %v247 = vld [vmem:[#allocation8 + $0xd8] sm:$0xff]
    %v248 = vld [vmem:[#allocation8 + $0xe0] sm:$0xff]
    %v249 = vld [vmem:[#allocation8 + $0xe8] sm:$0xff]
    %v250 = vld [vmem:[#allocation8 + $0xf0] sm:$0xff]
    %v251 = vld [vmem:[#allocation8 + $0xf8] sm:$0xff]
    %v252 = vld [vmem:[#allocation8 + $0x100] sm:$0xff]
    %v253 = vld [vmem:[#allocation8 + $0x108] sm:$0xff]
    %v254 = vld [vmem:[#allocation8 + $0x110] sm:$0xff]
    %v255 = vld [vmem:[#allocation8 + $0x118] sm:$0xff]
    %v256 = vld [vmem:[#allocation8 + $0x120] sm:$0xff]
    %v257 = vld [vmem:[#allocation8 + $0x128] sm:$0xff]
    %v258 = vld [vmem:[#allocation8 + $0x130] sm:$0xff]
    %v259 = vld [vmem:[#allocation8 + $0x138] sm:$0xff]
    %v260 = vld [vmem:[#allocation8 + $0x140] sm:$0xff]
    %v261 = vld [vmem:[#allocation8 + $0x148] sm:$0xff]
    %v262 = vld [vmem:[#allocation8 + $0x150] sm:$0xff]
    %v263 = vld [vmem:[#allocation8 + $0x158] sm:$0xff]
    %v264 = vld [vmem:[#allocation8 + $0x160] sm:$0xff]
    %v265 = vld [vmem:[#allocation8 + $0x168] sm:$0xff]
    %v266 = vld [vmem:[#allocation8 + $0x170] sm:$0xff]
    %v267 = vld [vmem:[#allocation8 + $0x178] sm:$0xff]
    %v268 = vld [vmem:[#allocation8 + $0x180] sm:$0xff]
    %v269 = vld [vmem:[#allocation8 + $0x188] sm:$0xff]
    %v270 = vld [vmem:[#allocation8 + $0x190] sm:$0xff]
    %v271 = vld [vmem:[#allocation8 + $0x198] sm:$0xff]
    %v272 = vld [vmem:[#allocation8 + $0x1a0] sm:$0xff]
    %v273 = vld [vmem:[#allocation8 + $0x1a8] sm:$0xff]
    %v274 = vld [vmem:[#allocation8 + $0x1b0] sm:$0xff]
    %v275 = vld [vmem:[#allocation8 + $0x1b8] sm:$0xff]
    %v276 = vld [vmem:[#allocation8 + $0x1c0] sm:$0xff]
    %v277 = vld [vmem:[#allocation8 + $0x1c8] sm:$0xff]
    %v278 = vld [vmem:[#allocation8 + $0x1d0] sm:$0xff]
    %v279 = vld [vmem:[#allocation8 + $0x1d8] sm:$0xff]
    %v280 = vld [vmem:[#allocation8 + $0x1e0] sm:$0xff]
    %v281 = vld [vmem:[#allocation8 + $0x1e8] sm:$0xff]
    %v282 = vld [vmem:[#allocation8 + $0x1f0] sm:$0xff]
    %v283 = vld [vmem:[#allocation8 + $0x1f8] sm:$0xff]
    %v284 = vld [vmem:[#allocation10] sm:$0xf]
    %v286 = vperm.slane %v284, 0
    %v287 = vperm.slane %v284, 1
    %v288 = vperm.slane %v284, 2
    %v289 = vperm.slane %v284, 3
    %v358 = vunpack.c.l.b16 %v220
    %v359 = vunpack.c.h.b16 %v220
    %v360 = vunpack.c.l.b16 %v221
    %v361 = vunpack.c.h.b16 %v221
    %v362 = vunpack.c.l.b16 %v222
    %v363 = vunpack.c.h.b16 %v222
    %v364 = vunpack.c.l.b16 %v223
    %v365 = vunpack.c.h.b16 %v223
    %v366 = vunpack.c.l.b16 %v224
    %v367 = vunpack.c.h.b16 %v224
    %v368 = vunpack.c.l.b16 %v225
    %v369 = vunpack.c.h.b16 %v225
    %v370 = vunpack.c.l.b16 %v226
    %v371 = vunpack.c.h.b16 %v226
    %v372 = vunpack.c.l.b16 %v227
    %v373 = vunpack.c.h.b16 %v227
    %v374 = vunpack.c.l.b16 %v228
    %v375 = vunpack.c.h.b16 %v228
    %v376 = vunpack.c.l.b16 %v229
    %v377 = vunpack.c.h.b16 %v229
    %v378 = vunpack.c.l.b16 %v230
    %v379 = vunpack.c.h.b16 %v230
    %v380 = vunpack.c.l.b16 %v231
    %v381 = vunpack.c.h.b16 %v231
    %v382 = vunpack.c.l.b16 %v232
    %v383 = vunpack.c.h.b16 %v232
    %v384 = vunpack.c.l.b16 %v233
    %v385 = vunpack.c.h.b16 %v233
    %v386 = vunpack.c.l.b16 %v234
    %v387 = vunpack.c.h.b16 %v234
    %v388 = vunpack.c.l.b16 %v235
    %v389 = vunpack.c.h.b16 %v235
    %v390 = vunpack.c.l.b16 %v236
    %v391 = vunpack.c.h.b16 %v236
    %v392 = vunpack.c.l.b16 %v237
    %v393 = vunpack.c.h.b16 %v237
    %v394 = vunpack.c.l.b16 %v238
    %v395 = vunpack.c.h.b16 %v238
    %v396 = vunpack.c.l.b16 %v239
    %v397 = vunpack.c.h.b16 %v239
    %v398 = vunpack.c.l.b16 %v240
    %v399 = vunpack.c.h.b16 %v240
    %v400 = vunpack.c.l.b16 %v241
    %v401 = vunpack.c.h.b16 %v241
    %v402 = vunpack.c.l.b16 %v242
    %v403 = vunpack.c.h.b16 %v242
    %v404 = vunpack.c.l.b16 %v243
    %v405 = vunpack.c.h.b16 %v243
    %v406 = vunpack.c.l.b16 %v244
    %v407 = vunpack.c.h.b16 %v244
    %v408 = vunpack.c.l.b16 %v245
    %v409 = vunpack.c.h.b16 %v245
    %v410 = vunpack.c.l.b16 %v246
    %v411 = vunpack.c.h.b16 %v246
    %v412 = vunpack.c.l.b16 %v247
    %v413 = vunpack.c.h.b16 %v247
    %v414 = vunpack.c.l.b16 %v248
    %v415 = vunpack.c.h.b16 %v248
    %v416 = vunpack.c.l.b16 %v249
    %v417 = vunpack.c.h.b16 %v249
    %v418 = vunpack.c.l.b16 %v250
    %v419 = vunpack.c.h.b16 %v250
    %v420 = vunpack.c.l.b16 %v251
    %v421 = vunpack.c.h.b16 %v251
    %v422 = vunpack.c.l.b16 %v252
    %v423 = vunpack.c.h.b16 %v252
    %v424 = vunpack.c.l.b16 %v253
    %v425 = vunpack.c.h.b16 %v253
    %v426 = vunpack.c.l.b16 %v254
    %v427 = vunpack.c.h.b16 %v254
    %v428 = vunpack.c.l.b16 %v255
    %v429 = vunpack.c.h.b16 %v255
    %v430 = vunpack.c.l.b16 %v256
    %v431 = vunpack.c.h.b16 %v256
    %v432 = vunpack.c.l.b16 %v257
    %v433 = vunpack.c.h.b16 %v257
    %v434 = vunpack.c.l.b16 %v258
    %v435 = vunpack.c.h.b16 %v258
    %v436 = vunpack.c.l.b16 %v259
    %v437 = vunpack.c.h.b16 %v259
    %v438 = vunpack.c.l.b16 %v260
    %v439 = vunpack.c.h.b16 %v260
    %v440 = vunpack.c.l.b16 %v261
    %v441 = vunpack.c.h.b16 %v261
    %v442 = vunpack.c.l.b16 %v262
    %v443 = vunpack.c.h.b16 %v262
    %v444 = vunpack.c.l.b16 %v263
    %v445 = vunpack.c.h.b16 %v263
    %v446 = vunpack.c.l.b16 %v264
    %v447 = vunpack.c.h.b16 %v264
    %v448 = vunpack.c.l.b16 %v265
    %v449 = vunpack.c.h.b16 %v265
    %v450 = vunpack.c.l.b16 %v266
    %v451 = vunpack.c.h.b16 %v266
    %v452 = vunpack.c.l.b16 %v267
    %v453 = vunpack.c.h.b16 %v267
    %v454 = vunpack.c.l.b16 %v268
    %v455 = vunpack.c.h.b16 %v268
    %v456 = vunpack.c.l.b16 %v269
    %v457 = vunpack.c.h.b16 %v269
    %v458 = vunpack.c.l.b16 %v270
    %v459 = vunpack.c.h.b16 %v270
    %v460 = vunpack.c.l.b16 %v271
    %v461 = vunpack.c.h.b16 %v271
    %v462 = vunpack.c.l.b16 %v272
    %v463 = vunpack.c.h.b16 %v272
    %v464 = vunpack.c.l.b16 %v273
    %v465 = vunpack.c.h.b16 %v273
    %v466 = vunpack.c.l.b16 %v274
    %v467 = vunpack.c.h.b16 %v274
    %v468 = vunpack.c.l.b16 %v275
    %v469 = vunpack.c.h.b16 %v275
    %v470 = vunpack.c.l.b16 %v276
    %v471 = vunpack.c.h.b16 %v276
    %v472 = vunpack.c.l.b16 %v277
    %v473 = vunpack.c.h.b16 %v277
    %v474 = vunpack.c.l.b16 %v278
    %v475 = vunpack.c.h.b16 %v278
    %v476 = vunpack.c.l.b16 %v279
    %v477 = vunpack.c.h.b16 %v279
    %v478 = vunpack.c.l.b16 %v280
    %v479 = vunpack.c.h.b16 %v280
    %v480 = vunpack.c.l.b16 %v281
    %v481 = vunpack.c.h.b16 %v281
    %v482 = vunpack.c.l.b16 %v282
    %v483 = vunpack.c.h.b16 %v282
    %v484 = vunpack.c.l.b16 %v283
    %v485 = vunpack.c.h.b16 %v283
    %v486 = vpack.c.b16 %v362, %v358
    %v487 = vpack.c.b16 %v363, %v359
    %v488 = vpack.c.b16 %v364, %v360
    %v489 = vpack.c.b16 %v365, %v361
    %v490 = vpack.c.b16 %v370, %v366
    %v491 = vpack.c.b16 %v371, %v367
    %v492 = vpack.c.b16 %v372, %v368
    %v493 = vpack.c.b16 %v373, %v369
    %v494 = vpack.c.b16 %v378, %v374
    %v495 = vpack.c.b16 %v379, %v375
    %v496 = vpack.c.b16 %v380, %v376
    %v497 = vpack.c.b16 %v381, %v377
    %v498 = vpack.c.b16 %v386, %v382
    %v499 = vpack.c.b16 %v387, %v383
    %v500 = vpack.c.b16 %v388, %v384
    %v501 = vpack.c.b16 %v389, %v385
    %v502 = vpack.c.b16 %v394, %v390
    %v503 = vpack.c.b16 %v395, %v391
    %v504 = vpack.c.b16 %v396, %v392
    %v505 = vpack.c.b16 %v397, %v393
    %v506 = vpack.c.b16 %v402, %v398
    %v507 = vpack.c.b16 %v403, %v399
    %v508 = vpack.c.b16 %v404, %v400
    %v509 = vpack.c.b16 %v405, %v401
    %v510 = vpack.c.b16 %v410, %v406
    %v511 = vpack.c.b16 %v411, %v407
    %v512 = vpack.c.b16 %v412, %v408
    %v513 = vpack.c.b16 %v413, %v409
    %v514 = vpack.c.b16 %v418, %v414
    %v515 = vpack.c.b16 %v419, %v415
    %v516 = vpack.c.b16 %v420, %v416
    %v517 = vpack.c.b16 %v421, %v417
    %v518 = vpack.c.b16 %v426, %v422
    %v519 = vpack.c.b16 %v427, %v423
    %v520 = vpack.c.b16 %v428, %v424
    %v521 = vpack.c.b16 %v429, %v425
    %v522 = vpack.c.b16 %v434, %v430
    %v523 = vpack.c.b16 %v435, %v431
    %v524 = vpack.c.b16 %v436, %v432
    %v525 = vpack.c.b16 %v437, %v433
    %v526 = vpack.c.b16 %v442, %v438
    %v527 = vpack.c.b16 %v443, %v439
    %v528 = vpack.c.b16 %v444, %v440
    %v529 = vpack.c.b16 %v445, %v441
    %v530 = vpack.c.b16 %v450, %v446
    %v531 = vpack.c.b16 %v451, %v447
    %v532 = vpack.c.b16 %v452, %v448
    %v533 = vpack.c.b16 %v453, %v449
    %v534 = vpack.c.b16 %v458, %v454
    %v535 = vpack.c.b16 %v459, %v455
    %v536 = vpack.c.b16 %v460, %v456
    %v537 = vpack.c.b16 %v461, %v457
    %v538 = vpack.c.b16 %v466, %v462
    %v539 = vpack.c.b16 %v467, %v463
    %v540 = vpack.c.b16 %v468, %v464
    %v541 = vpack.c.b16 %v469, %v465
    %v542 = vpack.c.b16 %v474, %v470
    %v543 = vpack.c.b16 %v475, %v471
    %v544 = vpack.c.b16 %v476, %v472
    %v545 = vpack.c.b16 %v477, %v473
    %v546 = vpack.c.b16 %v482, %v478
    %v547 = vpack.c.b16 %v483, %v479
    %v548 = vpack.c.b16 %v484, %v480
    %v549 = vpack.c.b16 %v485, %v481
    %614 = vmatpush.bf16.msra.mxu0 %v514
    %615 = vmatpush.bf16.msra.mxu0 %v510
    %616 = vmatpush.bf16.msra.mxu0 %v506
    %617 = vmatpush.bf16.msra.mxu0 %v502
    %618 = vmatpush.bf16.msra.mxu0 %v498
    %619 = vmatpush.bf16.msra.mxu0 %v494
    %620 = vmatpush.bf16.msra.mxu0 %v490
    %621 = vmatpush.bf16.msra.mxu0 %v486
    %622 = vmatmul.bf16.gmra.mxu0 %v218
    %v623 = vpop.f32.mrf.mxu0
    %v624 = vadd.f32 %v286, %v623
    %v625 = vpop.f32.mrf.mxu0
    %v626 = vadd.f32 %v286, %v625
    %627 = vdwg.mxu0
    %628 = vmatpush.bf16.msra.mxu0 %v546
    %629 = vmatpush.bf16.msra.mxu0 %v542
    %630 = vmatpush.bf16.msra.mxu0 %v538
    %631 = vmatpush.bf16.msra.mxu0 %v534
    %632 = vmatpush.bf16.msra.mxu0 %v530
    %633 = vmatpush.bf16.msra.mxu0 %v526
    %634 = vmatpush.bf16.msra.mxu0 %v522
    %635 = vmatpush.bf16.msra.mxu0 %v518
    %636 = vmatmul.bf16.gmra.mxu0 %v219
    %v637 = vpop.f32.mrf.mxu0
    %v638 = vadd.f32 %v624, %v637
    %v639 = vpop.f32.mrf.mxu0
    %v640 = vadd.f32 %v626, %v639
    %641 = vdwg.mxu0
    %642 = vmatpush.bf16.msra.mxu0 %v515
    %643 = vmatpush.bf16.msra.mxu0 %v511
    %644 = vmatpush.bf16.msra.mxu0 %v507
    %645 = vmatpush.bf16.msra.mxu0 %v503
    %646 = vmatpush.bf16.msra.mxu0 %v499
    %647 = vmatpush.bf16.msra.mxu0 %v495
    %648 = vmatpush.bf16.msra.mxu0 %v491
    %649 = vmatpush.bf16.msra.mxu0 %v487
    %650 = vmatmul.bf16.gmra.mxu0 %v218
    %v651 = vpop.f32.mrf.mxu0
    %v652 = vadd.f32 %v287, %v651
    %v653 = vpop.f32.mrf.mxu0
    %v654 = vadd.f32 %v287, %v653
    %655 = vdwg.mxu0
    %656 = vmatpush.bf16.msra.mxu0 %v547
    %657 = vmatpush.bf16.msra.mxu0 %v543
    %658 = vmatpush.bf16.msra.mxu0 %v539
    %659 = vmatpush.bf16.msra.mxu0 %v535
    %660 = vmatpush.bf16.msra.mxu0 %v531
    %661 = vmatpush.bf16.msra.mxu0 %v527
    %662 = vmatpush.bf16.msra.mxu0 %v523
    %663 = vmatpush.bf16.msra.mxu0 %v519
    %664 = vmatmul.bf16.gmra.mxu0 %v219
    %v665 = vpop.f32.mrf.mxu0
    %v666 = vadd.f32 %v652, %v665
    %v667 = vpop.f32.mrf.mxu0
    %v668 = vadd.f32 %v654, %v667
    %669 = vdwg.mxu0
    %670 = vmatpush.bf16.msra.mxu0 %v516
    %671 = vmatpush.bf16.msra.mxu0 %v512
    %672 = vmatpush.bf16.msra.mxu0 %v508
    %673 = vmatpush.bf16.msra.mxu0 %v504
    %674 = vmatpush.bf16.msra.mxu0 %v500
    %675 = vmatpush.bf16.msra.mxu0 %v496
    %676 = vmatpush.bf16.msra.mxu0 %v492
    %677 = vmatpush.bf16.msra.mxu0 %v488
    %678 = vmatmul.bf16.gmra.mxu0 %v218
    %v679 = vpop.f32.mrf.mxu0
    %v680 = vadd.f32 %v288, %v679
    %v681 = vpop.f32.mrf.mxu0
    %v682 = vadd.f32 %v288, %v681
    %683 = vdwg.mxu0
    %684 = vmatpush.bf16.msra.mxu0 %v548
    %685 = vmatpush.bf16.msra.mxu0 %v544
    %686 = vmatpush.bf16.msra.mxu0 %v540
    %687 = vmatpush.bf16.msra.mxu0 %v536
    %688 = vmatpush.bf16.msra.mxu0 %v532
    %689 = vmatpush.bf16.msra.mxu0 %v528
    %690 = vmatpush.bf16.msra.mxu0 %v524
    %691 = vmatpush.bf16.msra.mxu0 %v520
    %692 = vmatmul.bf16.gmra.mxu0 %v219
    %v693 = vpop.f32.mrf.mxu0
    %v694 = vadd.f32 %v680, %v693
    %v695 = vpop.f32.mrf.mxu0
    %v696 = vadd.f32 %v682, %v695
    %697 = vdwg.mxu0
    %698 = vmatpush.bf16.msra.mxu0 %v517
    %699 = vmatpush.bf16.msra.mxu0 %v513
    %700 = vmatpush.bf16.msra.mxu0 %v509
    %701 = vmatpush.bf16.msra.mxu0 %v505
    %702 = vmatpush.bf16.msra.mxu0 %v501
    %703 = vmatpush.bf16.msra.mxu0 %v497
    %704 = vmatpush.bf16.msra.mxu0 %v493
    %705 = vmatpush.bf16.msra.mxu0 %v489
    %706 = vmatmul.bf16.gmra.mxu0 %v218
    %v707 = vpop.f32.mrf.mxu0
    %v708 = vadd.f32 %v289, %v707
    %v709 = vpop.f32.mrf.mxu0
    %v710 = vadd.f32 %v289, %v709
    %711 = vdwg.mxu0
    %712 = vmatpush.bf16.msra.mxu0 %v549
    %713 = vmatpush.bf16.msra.mxu0 %v545
    %714 = vmatpush.bf16.msra.mxu0 %v541
    %715 = vmatpush.bf16.msra.mxu0 %v537
    %716 = vmatpush.bf16.msra.mxu0 %v533
    %717 = vmatpush.bf16.msra.mxu0 %v529
    %718 = vmatpush.bf16.msra.mxu0 %v525
    %719 = vmatpush.bf16.msra.mxu0 %v521
    %720 = vmatmul.bf16.gmra.mxu0 %v219
    %v721 = vpop.f32.mrf.mxu0
    %v722 = vadd.f32 %v708, %v721
    %v723 = vpop.f32.mrf.mxu0
    %v724 = vadd.f32 %v710, %v723
    %725 = vdwg.mxu0
    %v726 = vpack.c.bf16 %v666, %v638
    %v727 = vpack.c.bf16 %v722, %v694
    %v728 = vpack.c.bf16 %v668, %v640
    %v729 = vpack.c.bf16 %v724, %v696
    %v730 = vunpack.c.l.bf16 %v726
    %v731 = vunpack.c.h.bf16 %v726
    %v732 = vunpack.c.l.bf16 %v727
    %v733 = vunpack.c.h.bf16 %v727
    %v734 = vunpack.c.l.bf16 %v728
    %v735 = vunpack.c.h.bf16 %v728
    %v736 = vunpack.c.l.bf16 %v729
    %v737 = vunpack.c.h.bf16 %v729
    %v738 = vmax.f32 %v730, 0.0
    %v739 = vmax.f32 %v731, 0.0
    %v740 = vmax.f32 %v732, 0.0
    %v741 = vmax.f32 %v733, 0.0
    %v742 = vmax.f32 %v734, 0.0
    %v743 = vmax.f32 %v735, 0.0
    %v744 = vmax.f32 %v736, 0.0
    %v745 = vmax.f32 %v737, 0.0
    %v746 = vpack.c.bf16 %v742, %v738
    %v747 = vpack.c.bf16 %v743, %v739
    %v748 = vpack.c.bf16 %v744, %v740
    %v749 = vpack.c.bf16 %v745, %v741
    %v750 = vld [vmem:[#allocation11] sm:$0xff]
    %v751 = vld [vmem:[#allocation11 + $0x8] sm:$0xff]
    %v752 = vld [vmem:[#allocation11 + $0x10] sm:$0xff]
    %v753 = vld [vmem:[#allocation11 + $0x18] sm:$0xff]
    %v754 = vld [vmem:[#allocation11 + $0x20] sm:$0xff]
    %v755 = vld [vmem:[#allocation11 + $0x28] sm:$0xff]
    %v756 = vld [vmem:[#allocation11 + $0x30] sm:$0xff]
    %v757 = vld [vmem:[#allocation11 + $0x38] sm:$0xff]
    %v758 = vld [vmem:[#allocation11 + $0x40] sm:$0xff]
    %v759 = vld [vmem:[#allocation11 + $0x48] sm:$0xff]
    %v760 = vld [vmem:[#allocation11 + $0x50] sm:$0xff]
    %v761 = vld [vmem:[#allocation11 + $0x58] sm:$0xff]
    %v762 = vld [vmem:[#allocation11 + $0x60] sm:$0xff]
    %v763 = vld [vmem:[#allocation11 + $0x68] sm:$0xff]
    %v764 = vld [vmem:[#allocation11 + $0x70] sm:$0xff]
    %v765 = vld [vmem:[#allocation11 + $0x78] sm:$0xff]
    %v766 = vld [vmem:[#allocation11 + $0x80] sm:$0xff]
    %v767 = vld [vmem:[#allocation11 + $0x88] sm:$0xff]
    %v768 = vld [vmem:[#allocation11 + $0x90] sm:$0xff]
    %v769 = vld [vmem:[#allocation11 + $0x98] sm:$0xff]
    %v770 = vld [vmem:[#allocation11 + $0xa0] sm:$0xff]
    %v771 = vld [vmem:[#allocation11 + $0xa8] sm:$0xff]
    %v772 = vld [vmem:[#allocation11 + $0xb0] sm:$0xff]
    %v773 = vld [vmem:[#allocation11 + $0xb8] sm:$0xff]
    %v774 = vld [vmem:[#allocation11 + $0xc0] sm:$0xff]
    %v775 = vld [vmem:[#allocation11 + $0xc8] sm:$0xff]
    %v776 = vld [vmem:[#allocation11 + $0xd0] sm:$0xff]
    %v777 = vld [vmem:[#allocation11 + $0xd8] sm:$0xff]
    %v778 = vld [vmem:[#allocation11 + $0xe0] sm:$0xff]
    %v779 = vld [vmem:[#allocation11 + $0xe8] sm:$0xff]
    %v780 = vld [vmem:[#allocation11 + $0xf0] sm:$0xff]
    %v781 = vld [vmem:[#allocation11 + $0xf8] sm:$0xff]
    %v782 = vld [vmem:[#allocation11 + $0x100] sm:$0xff]
    %v783 = vld [vmem:[#allocation11 + $0x108] sm:$0xff]
    %v784 = vld [vmem:[#allocation11 + $0x110] sm:$0xff]
    %v785 = vld [vmem:[#allocation11 + $0x118] sm:$0xff]
    %v786 = vld [vmem:[#allocation11 + $0x120] sm:$0xff]
    %v787 = vld [vmem:[#allocation11 + $0x128] sm:$0xff]
    %v788 = vld [vmem:[#allocation11 + $0x130] sm:$0xff]
    %v789 = vld [vmem:[#allocation11 + $0x138] sm:$0xff]
    %v790 = vld [vmem:[#allocation11 + $0x140] sm:$0xff]
    %v791 = vld [vmem:[#allocation11 + $0x148] sm:$0xff]
    %v792 = vld [vmem:[#allocation11 + $0x150] sm:$0xff]
    %v793 = vld [vmem:[#allocation11 + $0x158] sm:$0xff]
    %v794 = vld [vmem:[#allocation11 + $0x160] sm:$0xff]
    %v795 = vld [vmem:[#allocation11 + $0x168] sm:$0xff]
    %v796 = vld [vmem:[#allocation11 + $0x170] sm:$0xff]
    %v797 = vld [vmem:[#allocation11 + $0x178] sm:$0xff]
    %v798 = vld [vmem:[#allocation11 + $0x180] sm:$0xff]
    %v799 = vld [vmem:[#allocation11 + $0x188] sm:$0xff]
    %v800 = vld [vmem:[#allocation11 + $0x190] sm:$0xff]
    %v801 = vld [vmem:[#allocation11 + $0x198] sm:$0xff]
    %v802 = vld [vmem:[#allocation11 + $0x1a0] sm:$0xff]
    %v803 = vld [vmem:[#allocation11 + $0x1a8] sm:$0xff]
    %v804 = vld [vmem:[#allocation11 + $0x1b0] sm:$0xff]
    %v805 = vld [vmem:[#allocation11 + $0x1b8] sm:$0xff]
    %v806 = vld [vmem:[#allocation11 + $0x1c0] sm:$0xff]
    %v807 = vld [vmem:[#allocation11 + $0x1c8] sm:$0xff]
    %v808 = vld [vmem:[#allocation11 + $0x1d0] sm:$0xff]
    %v809 = vld [vmem:[#allocation11 + $0x1d8] sm:$0xff]
    %v810 = vld [vmem:[#allocation11 + $0x1e0] sm:$0xff]
    %v811 = vld [vmem:[#allocation11 + $0x1e8] sm:$0xff]
    %v812 = vld [vmem:[#allocation11 + $0x1f0] sm:$0xff]
    %v813 = vld [vmem:[#allocation11 + $0x1f8] sm:$0xff]
    %v814 = vld [vmem:[%s6] sm:$0x3]
    %v816 = vperm.slane %v814, 0
    %v817 = vperm.slane %v814, 1
    %v884 = vunpack.c.l.b16 %v750
    %v885 = vunpack.c.h.b16 %v750
    %v886 = vunpack.c.l.b16 %v751
    %v887 = vunpack.c.h.b16 %v751
    %v888 = vunpack.c.l.b16 %v752
    %v889 = vunpack.c.h.b16 %v752
    %v890 = vunpack.c.l.b16 %v753
    %v891 = vunpack.c.h.b16 %v753
    %v892 = vunpack.c.l.b16 %v754
    %v893 = vunpack.c.h.b16 %v754
    %v894 = vunpack.c.l.b16 %v755
    %v895 = vunpack.c.h.b16 %v755
    %v896 = vunpack.c.l.b16 %v756
    %v897 = vunpack.c.h.b16 %v756
    %v898 = vunpack.c.l.b16 %v757
    %v899 = vunpack.c.h.b16 %v757
    %v900 = vunpack.c.l.b16 %v758
    %v901 = vunpack.c.h.b16 %v758
    %v902 = vunpack.c.l.b16 %v759
    %v903 = vunpack.c.h.b16 %v759
    %v904 = vunpack.c.l.b16 %v760
    %v905 = vunpack.c.h.b16 %v760
    %v906 = vunpack.c.l.b16 %v761
    %v907 = vunpack.c.h.b16 %v761
    %v908 = vunpack.c.l.b16 %v762
    %v909 = vunpack.c.h.b16 %v762
    %v910 = vunpack.c.l.b16 %v763
    %v911 = vunpack.c.h.b16 %v763
    %v912 = vunpack.c.l.b16 %v764
    %v913 = vunpack.c.h.b16 %v764
    %v914 = vunpack.c.l.b16 %v765
    %v915 = vunpack.c.h.b16 %v765
    %v916 = vunpack.c.l.b16 %v766
    %v917 = vunpack.c.h.b16 %v766
    %v918 = vunpack.c.l.b16 %v767
    %v919 = vunpack.c.h.b16 %v767
    %v920 = vunpack.c.l.b16 %v768
    %v921 = vunpack.c.h.b16 %v768
    %v922 = vunpack.c.l.b16 %v769
    %v923 = vunpack.c.h.b16 %v769
    %v924 = vunpack.c.l.b16 %v770
    %v925 = vunpack.c.h.b16 %v770
    %v926 = vunpack.c.l.b16 %v771
    %v927 = vunpack.c.h.b16 %v771
    %v928 = vunpack.c.l.b16 %v772
    %v929 = vunpack.c.h.b16 %v772
    %v930 = vunpack.c.l.b16 %v773
    %v931 = vunpack.c.h.b16 %v773
    %v932 = vunpack.c.l.b16 %v774
    %v933 = vunpack.c.h.b16 %v774
    %v934 = vunpack.c.l.b16 %v775
    %v935 = vunpack.c.h.b16 %v775
    %v936 = vunpack.c.l.b16 %v776
    %v937 = vunpack.c.h.b16 %v776
    %v938 = vunpack.c.l.b16 %v777
    %v939 = vunpack.c.h.b16 %v777
    %v940 = vunpack.c.l.b16 %v778
    %v941 = vunpack.c.h.b16 %v778
    %v942 = vunpack.c.l.b16 %v779
    %v943 = vunpack.c.h.b16 %v779
    %v944 = vunpack.c.l.b16 %v780
    %v945 = vunpack.c.h.b16 %v780
    %v946 = vunpack.c.l.b16 %v781
    %v947 = vunpack.c.h.b16 %v781
    %v948 = vunpack.c.l.b16 %v782
    %v949 = vunpack.c.h.b16 %v782
    %v950 = vunpack.c.l.b16 %v783
    %v951 = vunpack.c.h.b16 %v783
    %v952 = vunpack.c.l.b16 %v784
    %v953 = vunpack.c.h.b16 %v784
    %v954 = vunpack.c.l.b16 %v785
    %v955 = vunpack.c.h.b16 %v785
    %v956 = vunpack.c.l.b16 %v786
    %v957 = vunpack.c.h.b16 %v786
    %v958 = vunpack.c.l.b16 %v787
    %v959 = vunpack.c.h.b16 %v787
    %v960 = vunpack.c.l.b16 %v788
    %v961 = vunpack.c.h.b16 %v788
    %v962 = vunpack.c.l.b16 %v789
    %v963 = vunpack.c.h.b16 %v789
    %v964 = vunpack.c.l.b16 %v790
    %v965 = vunpack.c.h.b16 %v790
    %v966 = vunpack.c.l.b16 %v791
    %v967 = vunpack.c.h.b16 %v791
    %v968 = vunpack.c.l.b16 %v792
    %v969 = vunpack.c.h.b16 %v792
    %v970 = vunpack.c.l.b16 %v793
    %v971 = vunpack.c.h.b16 %v793
    %v972 = vunpack.c.l.b16 %v794
    %v973 = vunpack.c.h.b16 %v794
    %v974 = vunpack.c.l.b16 %v795
    %v975 = vunpack.c.h.b16 %v795
    %v976 = vunpack.c.l.b16 %v796
    %v977 = vunpack.c.h.b16 %v796
    %v978 = vunpack.c.l.b16 %v797
    %v979 = vunpack.c.h.b16 %v797
    %v980 = vunpack.c.l.b16 %v798
    %v981 = vunpack.c.h.b16 %v798
    %v982 = vunpack.c.l.b16 %v799
    %v983 = vunpack.c.h.b16 %v799
    %v984 = vunpack.c.l.b16 %v800
    %v985 = vunpack.c.h.b16 %v800
    %v986 = vunpack.c.l.b16 %v801
    %v987 = vunpack.c.h.b16 %v801
    %v988 = vunpack.c.l.b16 %v802
    %v989 = vunpack.c.h.b16 %v802
    %v990 = vunpack.c.l.b16 %v803
    %v991 = vunpack.c.h.b16 %v803
    %v992 = vunpack.c.l.b16 %v804
    %v993 = vunpack.c.h.b16 %v804
    %v994 = vunpack.c.l.b16 %v805
    %v995 = vunpack.c.h.b16 %v805
    %v996 = vunpack.c.l.b16 %v806
    %v997 = vunpack.c.h.b16 %v806
    %v998 = vunpack.c.l.b16 %v807
    %v999 = vunpack.c.h.b16 %v807
    %v1000 = vunpack.c.l.b16 %v808
    %v1001 = vunpack.c.h.b16 %v808
    %v1002 = vunpack.c.l.b16 %v809
    %v1003 = vunpack.c.h.b16 %v809
    %v1004 = vunpack.c.l.b16 %v810
    %v1005 = vunpack.c.h.b16 %v810
    %v1006 = vunpack.c.l.b16 %v811
    %v1007 = vunpack.c.h.b16 %v811
    %v1008 = vunpack.c.l.b16 %v812
    %v1009 = vunpack.c.h.b16 %v812
    %v1010 = vunpack.c.l.b16 %v813
    %v1011 = vunpack.c.h.b16 %v813
    %v1012 = vpack.c.b16 %v886, %v884
    %v1013 = vpack.c.b16 %v887, %v885
    %v1014 = vpack.c.b16 %v890, %v888
    %v1015 = vpack.c.b16 %v891, %v889
    %v1016 = vpack.c.b16 %v894, %v892
    %v1017 = vpack.c.b16 %v895, %v893
    %v1018 = vpack.c.b16 %v898, %v896
    %v1019 = vpack.c.b16 %v899, %v897
    %v1020 = vpack.c.b16 %v902, %v900
    %v1021 = vpack.c.b16 %v903, %v901
    %v1022 = vpack.c.b16 %v906, %v904
    %v1023 = vpack.c.b16 %v907, %v905
    %v1024 = vpack.c.b16 %v910, %v908
    %v1025 = vpack.c.b16 %v911, %v909
    %v1026 = vpack.c.b16 %v914, %v912
    %v1027 = vpack.c.b16 %v915, %v913
    %v1028 = vpack.c.b16 %v918, %v916
    %v1029 = vpack.c.b16 %v919, %v917
    %v1030 = vpack.c.b16 %v922, %v920
    %v1031 = vpack.c.b16 %v923, %v921
    %v1032 = vpack.c.b16 %v926, %v924
    %v1033 = vpack.c.b16 %v927, %v925
    %v1034 = vpack.c.b16 %v930, %v928
    %v1035 = vpack.c.b16 %v931, %v929
    %v1036 = vpack.c.b16 %v934, %v932
    %v1037 = vpack.c.b16 %v935, %v933
    %v1038 = vpack.c.b16 %v938, %v936
    %v1039 = vpack.c.b16 %v939, %v937
    %v1040 = vpack.c.b16 %v942, %v940
    %v1041 = vpack.c.b16 %v943, %v941
    %v1042 = vpack.c.b16 %v946, %v944
    %v1043 = vpack.c.b16 %v947, %v945
    %v1044 = vpack.c.b16 %v950, %v948
    %v1045 = vpack.c.b16 %v951, %v949
    %v1046 = vpack.c.b16 %v954, %v952
    %v1047 = vpack.c.b16 %v955, %v953
    %v1048 = vpack.c.b16 %v958, %v956
    %v1049 = vpack.c.b16 %v959, %v957
    %v1050 = vpack.c.b16 %v962, %v960
    %v1051 = vpack.c.b16 %v963, %v961
    %v1052 = vpack.c.b16 %v966, %v964
    %v1053 = vpack.c.b16 %v967, %v965
    %v1054 = vpack.c.b16 %v970, %v968
    %v1055 = vpack.c.b16 %v971, %v969
    %v1056 = vpack.c.b16 %v974, %v972
    %v1057 = vpack.c.b16 %v975, %v973
    %v1058 = vpack.c.b16 %v978, %v976
    %v1059 = vpack.c.b16 %v979, %v977
    %v1060 = vpack.c.b16 %v982, %v980
    %v1061 = vpack.c.b16 %v983, %v981
    %v1062 = vpack.c.b16 %v986, %v984
    %v1063 = vpack.c.b16 %v987, %v985
    %v1064 = vpack.c.b16 %v990, %v988
    %v1065 = vpack.c.b16 %v991, %v989
    %v1066 = vpack.c.b16 %v994, %v992
    %v1067 = vpack.c.b16 %v995, %v993
    %v1068 = vpack.c.b16 %v998, %v996
    %v1069 = vpack.c.b16 %v999, %v997
    %v1070 = vpack.c.b16 %v1002, %v1000
    %v1071 = vpack.c.b16 %v1003, %v1001
    %v1072 = vpack.c.b16 %v1006, %v1004
    %v1073 = vpack.c.b16 %v1007, %v1005
    %v1074 = vpack.c.b16 %v1010, %v1008
    %v1075 = vpack.c.b16 %v1011, %v1009
    %1140 = vmatpush.bf16.msra.mxu0 %v1026
    %1141 = vmatpush.bf16.msra.mxu0 %v1024
    %1142 = vmatpush.bf16.msra.mxu0 %v1022
    %1143 = vmatpush.bf16.msra.mxu0 %v1020
    %1144 = vmatpush.bf16.msra.mxu0 %v1018
    %1145 = vmatpush.bf16.msra.mxu0 %v1016
    %1146 = vmatpush.bf16.msra.mxu0 %v1014
    %1147 = vmatpush.bf16.msra.mxu0 %v1012
    %1148 = vmatmul.bf16.gmra.mxu0 %v746
    %v1149 = vpop.f32.mrf.mxu0
    %v1150 = vadd.f32 %v816, %v1149
    %v1151 = vpop.f32.mrf.mxu0
    %v1152 = vadd.f32 %v816, %v1151
    %1153 = vdwg.mxu0
    %1154 = vmatpush.bf16.msra.mxu0 %v1042
    %1155 = vmatpush.bf16.msra.mxu0 %v1040
    %1156 = vmatpush.bf16.msra.mxu0 %v1038
    %1157 = vmatpush.bf16.msra.mxu0 %v1036
    %1158 = vmatpush.bf16.msra.mxu0 %v1034
    %1159 = vmatpush.bf16.msra.mxu0 %v1032
    %1160 = vmatpush.bf16.msra.mxu0 %v1030
    %1161 = vmatpush.bf16.msra.mxu0 %v1028
    %1162 = vmatmul.bf16.gmra.mxu0 %v747
    %v1163 = vpop.f32.mrf.mxu0
    %v1164 = vadd.f32 %v1150, %v1163
    %v1165 = vpop.f32.mrf.mxu0
    %v1166 = vadd.f32 %v1152, %v1165
    %1167 = vdwg.mxu0
    %1168 = vmatpush.bf16.msra.mxu0 %v1058
    %1169 = vmatpush.bf16.msra.mxu0 %v1056
    %1170 = vmatpush.bf16.msra.mxu0 %v1054
    %1171 = vmatpush.bf16.msra.mxu0 %v1052
    %1172 = vmatpush.bf16.msra.mxu0 %v1050
    %1173 = vmatpush.bf16.msra.mxu0 %v1048
    %1174 = vmatpush.bf16.msra.mxu0 %v1046
    %1175 = vmatpush.bf16.msra.mxu0 %v1044
    %1176 = vmatmul.bf16.gmra.mxu0 %v748
    %v1177 = vpop.f32.mrf.mxu0
    %v1178 = vadd.f32 %v1164, %v1177
    %v1179 = vpop.f32.mrf.mxu0
    %v1180 = vadd.f32 %v1166, %v1179
    %1181 = vdwg.mxu0
    %1182 = vmatpush.bf16.msra.mxu0 %v1074
    %1183 = vmatpush.bf16.msra.mxu0 %v1072
    %1184 = vmatpush.bf16.msra.mxu0 %v1070
    %1185 = vmatpush.bf16.msra.mxu0 %v1068
    %1186 = vmatpush.bf16.msra.mxu0 %v1066
    %1187 = vmatpush.bf16.msra.mxu0 %v1064
    %1188 = vmatpush.bf16.msra.mxu0 %v1062
    %1189 = vmatpush.bf16.msra.mxu0 %v1060
    %1190 = vmatmul.bf16.gmra.mxu0 %v749
    %v1191 = vpop.f32.mrf.mxu0
    %v1192 = vadd.f32 %v1178, %v1191
    %v1193 = vpop.f32.mrf.mxu0
    %v1194 = vadd.f32 %v1180, %v1193
    %1195 = vdwg.mxu0
    %1196 = vmatpush.bf16.msra.mxu0 %v1027
    %1197 = vmatpush.bf16.msra.mxu0 %v1025
    %1198 = vmatpush.bf16.msra.mxu0 %v1023
    %1199 = vmatpush.bf16.msra.mxu0 %v1021
    %1200 = vmatpush.bf16.msra.mxu0 %v1019
    %1201 = vmatpush.bf16.msra.mxu0 %v1017
    %1202 = vmatpush.bf16.msra.mxu0 %v1015
    %1203 = vmatpush.bf16.msra.mxu0 %v1013
    %1204 = vmatmul.bf16.gmra.mxu0 %v746
    %v1205 = vpop.f32.mrf.mxu0
    %v1206 = vadd.f32 %v817, %v1205
    %v1207 = vpop.f32.mrf.mxu0
    %v1208 = vadd.f32 %v817, %v1207
    %1209 = vdwg.mxu0
    %1210 = vmatpush.bf16.msra.mxu0 %v1043
    %1211 = vmatpush.bf16.msra.mxu0 %v1041
    %1212 = vmatpush.bf16.msra.mxu0 %v1039
    %1213 = vmatpush.bf16.msra.mxu0 %v1037
    %1214 = vmatpush.bf16.msra.mxu0 %v1035
    %1215 = vmatpush.bf16.msra.mxu0 %v1033
    %1216 = vmatpush.bf16.msra.mxu0 %v1031
    %1217 = vmatpush.bf16.msra.mxu0 %v1029
    %1218 = vmatmul.bf16.gmra.mxu0 %v747
    %v1219 = vpop.f32.mrf.mxu0
    %v1220 = vadd.f32 %v1206, %v1219
    %v1221 = vpop.f32.mrf.mxu0
    %v1222 = vadd.f32 %v1208, %v1221
    %1223 = vdwg.mxu0
    %1224 = vmatpush.bf16.msra.mxu0 %v1059
    %1225 = vmatpush.bf16.msra.mxu0 %v1057
    %1226 = vmatpush.bf16.msra.mxu0 %v1055
    %1227 = vmatpush.bf16.msra.mxu0 %v1053
    %1228 = vmatpush.bf16.msra.mxu0 %v1051
    %1229 = vmatpush.bf16.msra.mxu0 %v1049
    %1230 = vmatpush.bf16.msra.mxu0 %v1047
    %1231 = vmatpush.bf16.msra.mxu0 %v1045
    %1232 = vmatmul.bf16.gmra.mxu0 %v748
    %v1233 = vpop.f32.mrf.mxu0
    %v1234 = vadd.f32 %v1220, %v1233
    %v1235 = vpop.f32.mrf.mxu0
    %v1236 = vadd.f32 %v1222, %v1235
    %1237 = vdwg.mxu0
    %1238 = vmatpush.bf16.msra.mxu0 %v1075
    %1239 = vmatpush.bf16.msra.mxu0 %v1073
    %1240 = vmatpush.bf16.msra.mxu0 %v1071
    %1241 = vmatpush.bf16.msra.mxu0 %v1069
    %1242 = vmatpush.bf16.msra.mxu0 %v1067
    %1243 = vmatpush.bf16.msra.mxu0 %v1065
    %1244 = vmatpush.bf16.msra.mxu0 %v1063
    %1245 = vmatpush.bf16.msra.mxu0 %v1061
    %1246 = vmatmul.bf16.gmra.mxu0 %v749
    %v1247 = vpop.f32.mrf.mxu0
    %v1248 = vadd.f32 %v1234, %v1247
    %v1249 = vpop.f32.mrf.mxu0
    %v1250 = vadd.f32 %v1236, %v1249
    %1251 = vdwg.mxu0
    %v1252 = vpack.c.bf16 %v1248, %v1192
    %v1253 = vpack.c.bf16 %v1250, %v1194
    %v1254 = vunpack.c.l.bf16 %v1252
    %v1255 = vunpack.c.h.bf16 %v1252
    %v1256 = vunpack.c.l.bf16 %v1253
    %v1257 = vunpack.c.h.bf16 %v1253
    %v1258 = vmax.f32 %v1254, 0.0
    %v1259 = vmax.f32 %v1255, 0.0
    %v1260 = vmax.f32 %v1256, 0.0
    %v1261 = vmax.f32 %v1257, 0.0
    %v1262 = vpack.c.bf16 %v1260, %v1258
    %v1263 = vpack.c.bf16 %v1261, %v1259
    %v1264 = vld [vmem:[#allocation13] sm:$0xff]
    %v1265 = vld [vmem:[#allocation13 + $0x8] sm:$0xff]
    %v1266 = vld [vmem:[#allocation13 + $0x10] sm:$0xff]
    %v1267 = vld [vmem:[#allocation13 + $0x18] sm:$0xff]
    %v1268 = vld [vmem:[#allocation13 + $0x20] sm:$0xff]
    %v1269 = vld [vmem:[#allocation13 + $0x28] sm:$0xff]
    %v1270 = vld [vmem:[#allocation13 + $0x30] sm:$0xff]
    %v1271 = vld [vmem:[#allocation13 + $0x38] sm:$0xff]
    %v1272 = vld [vmem:[#allocation13 + $0x40] sm:$0xff]
    %v1273 = vld [vmem:[#allocation13 + $0x48] sm:$0xff]
    %v1274 = vld [vmem:[#allocation13 + $0x50] sm:$0xff]
    %v1275 = vld [vmem:[#allocation13 + $0x58] sm:$0xff]
    %v1276 = vld [vmem:[#allocation13 + $0x60] sm:$0xff]
    %v1277 = vld [vmem:[#allocation13 + $0x68] sm:$0xff]
    %v1278 = vld [vmem:[#allocation13 + $0x70] sm:$0xff]
    %v1279 = vld [vmem:[#allocation13 + $0x78] sm:$0xff]
    %v1280 = vld [vmem:[#allocation13 + $0x80] sm:$0xff]
    %v1281 = vld [vmem:[#allocation13 + $0x88] sm:$0xff]
    %v1282 = vld [vmem:[#allocation13 + $0x90] sm:$0xff]
    %v1283 = vld [vmem:[#allocation13 + $0x98] sm:$0xff]
    %v1284 = vld [vmem:[#allocation13 + $0xa0] sm:$0xff]
    %v1285 = vld [vmem:[#allocation13 + $0xa8] sm:$0xff]
    %v1286 = vld [vmem:[#allocation13 + $0xb0] sm:$0xff]
    %v1287 = vld [vmem:[#allocation13 + $0xb8] sm:$0xff]
    %v1288 = vld [vmem:[#allocation13 + $0xc0] sm:$0xff]
    %v1289 = vld [vmem:[#allocation13 + $0xc8] sm:$0xff]
    %v1290 = vld [vmem:[#allocation13 + $0xd0] sm:$0xff]
    %v1291 = vld [vmem:[#allocation13 + $0xd8] sm:$0xff]
    %v1292 = vld [vmem:[#allocation13 + $0xe0] sm:$0xff]
    %v1293 = vld [vmem:[#allocation13 + $0xe8] sm:$0xff]
    %v1294 = vld [vmem:[#allocation13 + $0xf0] sm:$0xff]
    %v1295 = vld [vmem:[#allocation13 + $0xf8] sm:$0xff]
    %v1296 = vld [vmem:[%s8] sm:$0x3]
    %v1298 = vperm.slane %v1296, 0
    %v1299 = vperm.slane %v1296, 1
    %v1334 = vunpack.c.l.b16 %v1264
    %v1335 = vunpack.c.h.b16 %v1264
    %v1336 = vunpack.c.l.b16 %v1265
    %v1337 = vunpack.c.h.b16 %v1265
    %v1338 = vunpack.c.l.b16 %v1266
    %v1339 = vunpack.c.h.b16 %v1266
    %v1340 = vunpack.c.l.b16 %v1267
    %v1341 = vunpack.c.h.b16 %v1267
    %v1342 = vunpack.c.l.b16 %v1268
    %v1343 = vunpack.c.h.b16 %v1268
    %v1344 = vunpack.c.l.b16 %v1269
    %v1345 = vunpack.c.h.b16 %v1269
    %v1346 = vunpack.c.l.b16 %v1270
    %v1347 = vunpack.c.h.b16 %v1270
    %v1348 = vunpack.c.l.b16 %v1271
    %v1349 = vunpack.c.h.b16 %v1271
    %v1350 = vunpack.c.l.b16 %v1272
    %v1351 = vunpack.c.h.b16 %v1272
    %v1352 = vunpack.c.l.b16 %v1273
    %v1353 = vunpack.c.h.b16 %v1273
    %v1354 = vunpack.c.l.b16 %v1274
    %v1355 = vunpack.c.h.b16 %v1274
    %v1356 = vunpack.c.l.b16 %v1275
    %v1357 = vunpack.c.h.b16 %v1275
    %v1358 = vunpack.c.l.b16 %v1276
    %v1359 = vunpack.c.h.b16 %v1276
    %v1360 = vunpack.c.l.b16 %v1277
    %v1361 = vunpack.c.h.b16 %v1277
    %v1362 = vunpack.c.l.b16 %v1278
    %v1363 = vunpack.c.h.b16 %v1278
    %v1364 = vunpack.c.l.b16 %v1279
    %v1365 = vunpack.c.h.b16 %v1279
    %v1366 = vunpack.c.l.b16 %v1280
    %v1367 = vunpack.c.h.b16 %v1280
    %v1368 = vunpack.c.l.b16 %v1281
    %v1369 = vunpack.c.h.b16 %v1281
    %v1370 = vunpack.c.l.b16 %v1282
    %v1371 = vunpack.c.h.b16 %v1282
    %v1372 = vunpack.c.l.b16 %v1283
    %v1373 = vunpack.c.h.b16 %v1283
    %v1374 = vunpack.c.l.b16 %v1284
    %v1375 = vunpack.c.h.b16 %v1284
    %v1376 = vunpack.c.l.b16 %v1285
    %v1377 = vunpack.c.h.b16 %v1285
    %v1378 = vunpack.c.l.b16 %v1286
    %v1379 = vunpack.c.h.b16 %v1286
    %v1380 = vunpack.c.l.b16 %v1287
    %v1381 = vunpack.c.h.b16 %v1287
    %v1382 = vunpack.c.l.b16 %v1288
    %v1383 = vunpack.c.h.b16 %v1288
    %v1384 = vunpack.c.l.b16 %v1289
    %v1385 = vunpack.c.h.b16 %v1289
    %v1386 = vunpack.c.l.b16 %v1290
    %v1387 = vunpack.c.h.b16 %v1290
    %v1388 = vunpack.c.l.b16 %v1291
    %v1389 = vunpack.c.h.b16 %v1291
    %v1390 = vunpack.c.l.b16 %v1292
    %v1391 = vunpack.c.h.b16 %v1292
    %v1392 = vunpack.c.l.b16 %v1293
    %v1393 = vunpack.c.h.b16 %v1293
    %v1394 = vunpack.c.l.b16 %v1294
    %v1395 = vunpack.c.h.b16 %v1294
    %v1396 = vunpack.c.l.b16 %v1295
    %v1397 = vunpack.c.h.b16 %v1295
    %v1398 = vpack.c.b16 %v1336, %v1334
    %v1399 = vpack.c.b16 %v1337, %v1335
    %v1400 = vpack.c.b16 %v1340, %v1338
    %v1401 = vpack.c.b16 %v1341, %v1339
    %v1402 = vpack.c.b16 %v1344, %v1342
    %v1403 = vpack.c.b16 %v1345, %v1343
    %v1404 = vpack.c.b16 %v1348, %v1346
    %v1405 = vpack.c.b16 %v1349, %v1347
    %v1406 = vpack.c.b16 %v1352, %v1350
    %v1407 = vpack.c.b16 %v1353, %v1351
    %v1408 = vpack.c.b16 %v1356, %v1354
    %v1409 = vpack.c.b16 %v1357, %v1355
    %v1410 = vpack.c.b16 %v1360, %v1358
    %v1411 = vpack.c.b16 %v1361, %v1359
    %v1412 = vpack.c.b16 %v1364, %v1362
    %v1413 = vpack.c.b16 %v1365, %v1363
    %v1414 = vpack.c.b16 %v1368, %v1366
    %v1415 = vpack.c.b16 %v1369, %v1367
    %v1416 = vpack.c.b16 %v1372, %v1370
    %v1417 = vpack.c.b16 %v1373, %v1371
    %v1418 = vpack.c.b16 %v1376, %v1374
    %v1419 = vpack.c.b16 %v1377, %v1375
    %v1420 = vpack.c.b16 %v1380, %v1378
    %v1421 = vpack.c.b16 %v1381, %v1379
    %v1422 = vpack.c.b16 %v1384, %v1382
    %v1423 = vpack.c.b16 %v1385, %v1383
    %v1424 = vpack.c.b16 %v1388, %v1386
    %v1425 = vpack.c.b16 %v1389, %v1387
    %v1426 = vpack.c.b16 %v1392, %v1390
    %v1427 = vpack.c.b16 %v1393, %v1391
    %v1428 = vpack.c.b16 %v1396, %v1394
    %v1429 = vpack.c.b16 %v1397, %v1395
    %1462 = vmatpush.bf16.msra.mxu0 %v1412
    %1463 = vmatpush.bf16.msra.mxu0 %v1410
    %1464 = vmatpush.bf16.msra.mxu0 %v1408
    %1465 = vmatpush.bf16.msra.mxu0 %v1406
    %1466 = vmatpush.bf16.msra.mxu0 %v1404
    %1467 = vmatpush.bf16.msra.mxu0 %v1402
    %1468 = vmatpush.bf16.msra.mxu0 %v1400
    %1469 = vmatpush.bf16.msra.mxu0 %v1398
    %1470 = vmatmul.bf16.gmra.mxu0 %v1262
    %v1471 = vpop.f32.mrf.mxu0
    %v1472 = vadd.f32 %v1298, %v1471
    %v1473 = vpop.f32.mrf.mxu0
    %v1474 = vadd.f32 %v1298, %v1473
    %1475 = vdwg.mxu0
    %1476 = vmatpush.bf16.msra.mxu0 %v1428
    %1477 = vmatpush.bf16.msra.mxu0 %v1426
    %1478 = vmatpush.bf16.msra.mxu0 %v1424
    %1479 = vmatpush.bf16.msra.mxu0 %v1422
    %1480 = vmatpush.bf16.msra.mxu0 %v1420
    %1481 = vmatpush.bf16.msra.mxu0 %v1418
    %1482 = vmatpush.bf16.msra.mxu0 %v1416
    %1483 = vmatpush.bf16.msra.mxu0 %v1414
    %1484 = vmatmul.bf16.gmra.mxu0 %v1263
    %v1485 = vpop.f32.mrf.mxu0
    %v1486 = vadd.f32 %v1472, %v1485
    %v1487 = vpop.f32.mrf.mxu0
    %v1488 = vadd.f32 %v1474, %v1487
    %1489 = vdwg.mxu0
    %1490 = vmatpush.bf16.msra.mxu0 %v1413
    %1491 = vmatpush.bf16.msra.mxu0 %v1411
    %1492 = vmatpush.bf16.msra.mxu0 %v1409
    %1493 = vmatpush.bf16.msra.mxu0 %v1407
    %1494 = vmatpush.bf16.msra.mxu0 %v1405
    %1495 = vmatpush.bf16.msra.mxu0 %v1403
    %1496 = vmatpush.bf16.msra.mxu0 %v1401
    %1497 = vmatpush.bf16.msra.mxu0 %v1399
    %1498 = vmatmul.bf16.gmra.mxu0 %v1262
    %v1499 = vpop.f32.mrf.mxu0
    %v1500 = vadd.f32 %v1299, %v1499
    %v1501 = vpop.f32.mrf.mxu0
    %v1502 = vadd.f32 %v1299, %v1501
    %1503 = vdwg.mxu0
    %1504 = vmatpush.bf16.msra.mxu0 %v1429
    %1505 = vmatpush.bf16.msra.mxu0 %v1427
    %1506 = vmatpush.bf16.msra.mxu0 %v1425
    %1507 = vmatpush.bf16.msra.mxu0 %v1423
    %1508 = vmatpush.bf16.msra.mxu0 %v1421
    %1509 = vmatpush.bf16.msra.mxu0 %v1419
    %1510 = vmatpush.bf16.msra.mxu0 %v1417
    %1511 = vmatpush.bf16.msra.mxu0 %v1415
    %1512 = vmatmul.bf16.gmra.mxu0 %v1263
    %v1513 = vpop.f32.mrf.mxu0
    %v1514 = vadd.f32 %v1500, %v1513
    %v1515 = vpop.f32.mrf.mxu0
    %v1516 = vadd.f32 %v1502, %v1515
    %1517 = vdwg.mxu0
    %1518 = vst [vmem:[#allocation14] sm:$0xff] %v1486
    %1519 = vst [vmem:[#allocation14 + $0x8] sm:$0xff] %v1514
    %1520 = vst [vmem:[#allocation14 + $0x10] sm:$0xff] %v1488
    %1521 = vst [vmem:[#allocation14 + $0x18] sm:$0xff] %v1516
    // Predicated region
    $region66: #{tpu_custom_call.1} parent=1 // pred_check
      _
    $region67: #{tpu_custom_call.1} parent=1 // pred_check_branch
      %1523 = sbr.rel (0) target = $region69
    $region68: #{tpu_custom_call.1} parent=1 // pred_region
      %1525 = vsyncadd [#allocation4], 0
      %s1526 = sshll.u32 [#allocation14], 4
      %s1527 = int_to_ptr.vmem [resolvable:$true] %s1526
      %s1528 = sshll.u32 %s9, 4
      %s1529 = int_to_ptr.hbm [resolvable:$true] %s1528
      %1534 = dma.vmem_to_hbm [thread:$0]  %s1527, 512, %s1529, [#allocation4], 256, 256, 16
    $region69: #{tpu_custom_call.1} parent=1 // pred_fallthru
      _
    // Predicated region
    $region70: #{tpu_custom_call.1} parent=1 // pred_check
      _
    $region71: #{tpu_custom_call.1} parent=1 // pred_check_branch
      %1536 = sbr.rel (0) target = $region73
    $region72: #{tpu_custom_call.1} parent=1 // pred_region
      %1538 = dma.done [#allocation4], 512
    $region73: #{tpu_custom_call.1} parent=1 // pred_fallthru
      _
    %1539 = vsyncpa [#allocation3], 1
    %1540 = vsyncpa [#allocation6], 1
    %1541 = vsyncpa [#allocation9], 1
    %1542 = vsyncpa [#allocation12], 1
    %1543 = vsyncpa [#allocation4], 1

// kernel: tpu_custom_call.1
$region0: #{tpu_custom_call.1}
  #allocation0 [shape = 'u32[]', space=smem, size = 0x4, offset = 0x4, fixed_abs, tag = 'smem constant byte address 0x4 - core index']
  #allocation1 [shape = 'u32[72,128]{1,0:T(1,128)}', space=vmem, size = 0x9000, scoped, tag = 'internal scratch']
  %s0 = inlined_call_operand.hbm [shape: bf16[16,32], index: 0, kind: input, shape index: {}]
  %s1 = inlined_call_operand.hbm [shape: bf16[32,256], index: 1, kind: input, shape index: {}]
  %s2 = inlined_call_operand.hbm [shape: f32[1,256], index: 2, kind: input, shape index: {}]
  %s3 = inlined_call_operand.hbm [shape: bf16[256,512], index: 3, kind: input, shape index: {}]
  %s4 = inlined_call_operand.hbm [shape: f32[1,512], index: 4, kind: input, shape index: {}]
  %s5 = inlined_call_operand.hbm [shape: bf16[512,256], index: 5, kind: input, shape index: {}]
  %s6 = inlined_call_operand.vmem [shape: f32[1,256], index: 6, kind: input, shape index: {}]
  %s7 = inlined_call_operand.hbm [shape: bf16[256,256], index: 7, kind: input, shape index: {}]
  %s8 = inlined_call_operand.vmem [shape: f32[1,256], index: 8, kind: input, shape index: {}]
  %s9 = inlined_call_operand.hbm [shape: f32[16,256], index: 9, kind: output, shape index: {}]
  %s10 = sld [smem:[#allocation0]]
  $region74: #{tpu_custom_call.1} parent=0
    _
  %s12 = ssub.s32 1, %s10
  %s13 = scalar_select 0, %s12, %s10
  $region1: #{tpu_custom_call.1} parent=0
    #allocation2 [shape = 'u8[4096]{0}', space=vmem, size = 0x1000, scoped, tag = 'input window, operand 0, single buffered']
    #allocation3 [shape = 's32[1]{0}', space=sflag, size = 0x4, scoped, tag = 'scoped memory for tpu_custom_call.1']
    #allocation4 [shape = 's32[1]{0}', space=sflag, size = 0x4, scoped, tag = 'scoped memory for tpu_custom_call.1']
    #allocation5 [shape = 'u8[16384]{0}', space=vmem, size = 0x4000, scoped, tag = 'input window, operand 1, single buffered']
    #allocation6 [shape = 's32[1]{0}', space=sflag, size = 0x4, scoped, tag = 'scoped memory for tpu_custom_call.1']
    #allocation7 [shape = 'u8[1024]{0}', space=vmem, size = 0x400, scoped, tag = 'input window, operand 2, single buffered']
    #allocation8 [shape = 'u8[262144]{0}', space=vmem, size = 0x40000, scoped, tag = 'input window, operand 3, single buffered']
    #allocation9 [shape = 's32[1]{0}', space=sflag, size = 0x4, scoped, tag = 'scoped memory for tpu_custom_call.1']
    #allocation10 [shape = 'u8[2048]{0}', space=vmem, size = 0x800, scoped, tag = 'input window, operand 4, single buffered']
    #allocation11 [shape = 'u8[262144]{0}', space=vmem, size = 0x40000, scoped, tag = 'input window, operand 5, single buffered']
    #allocation12 [shape = 's32[1]{0}', space=sflag, size = 0x4, scoped, tag = 'scoped memory for tpu_custom_call.1']
    #allocation13 [shape = 'u8[131072]{0}', space=vmem, size = 0x20000, scoped, tag = 'input window, operand 7, single buffered']
    #allocation14 [shape = 'u8[16384]{0}', space=vmem, size = 0x4000, scoped, tag = 'output window, operand 0, single buffered']
    %14 = vsyncpa [#allocation3], 0
    %15 = vsyncpa [#allocation6], 0
    %16 = vsyncpa [#allocation9], 0
    %17 = vsyncpa [#allocation12], 0
    %18 = vsyncpa [#allocation4], 0
    // Predicated region
    $region2: #{tpu_custom_call.1} parent=1 // pred_check
      _
    $region3: #{tpu_custom_call.1} parent=1 // pred_check_branch
      %20 = sbr.rel (0) target = $region5
    $region4: #{tpu_custom_call.1} parent=1 // pred_region
      %22 = vsyncadd [#allocation3], 0
      %s23 = sshll.u32 %s0, 4
      %s24 = int_to_ptr.hbm [resolvable:$true] %s23
      %s25 = sshll.u32 [#allocation2], 4
      %s26 = int_to_ptr.vmem [resolvable:$true] %s25
      %31 = dma.hbm_to_vmem [thread:$0]  %s24, 128, %s26, [#allocation3], 64, 64, 4
    $region5: #{tpu_custom_call.1} parent=1 // pred_fallthru
      _
    // Predicated region
    $region6: #{tpu_custom_call.1} parent=1 // pred_check
      _
    $region7: #{tpu_custom_call.1} parent=1 // pred_check_branch
      %33 = sbr.rel (0) target = $region9
    $region8: #{tpu_custom_call.1} parent=1 // pred_region
      %35 = vsyncadd [#allocation6], 0
      %s36 = sshll.u32 %s1, 4
      %s37 = int_to_ptr.hbm [resolvable:$true] %s36
      %s38 = sshll.u32 [#allocation5], 4
      %s39 = int_to_ptr.vmem [resolvable:$true] %s38
      %44 = dma.hbm_to_vmem [thread:$0]  %s37, 512, %s39, [#allocation6], 128, 128, 8
    $region9: #{tpu_custom_call.1} parent=1 // pred_fallthru
      _
    // Predicated region
    $region10: #{tpu_custom_call.1} parent=1 // pred_check
      _
    $region11: #{tpu_custom_call.1} parent=1 // pred_check_branch
      %46 = sbr.rel (0) target = $region13
    $region12: #{tpu_custom_call.1} parent=1 // pred_region
      %48 = vsyncadd [#allocation6], 0
      %s50 = sshll.u32 %s2, 4
      %s51 = int_to_ptr.hbm [resolvable:$true] %s50
      %s52 = sshll.u32 [#allocation7], 4
      %s53 = int_to_ptr.vmem [resolvable:$true] %s52
      %55 = dma.hbm_to_vmem [thread:$0]  %s51, 32, %s53, [#allocation6]
    $region13: #{tpu_custom_call.1} parent=1 // pred_fallthru
      _
    // Predicated region
    $region14: #{tpu_custom_call.1} parent=1 // pred_check
      _
    $region15: #{tpu_custom_call.1} parent=1 // pred_check_branch
      %57 = sbr.rel (0) target = $region17
    $region16: #{tpu_custom_call.1} parent=1 // pred_region
      %59 = vsyncadd [#allocation9], 0
      %s60 = sshll.u32 %s3, 4
      %s61 = int_to_ptr.hbm [resolvable:$true] %s60
      %s62 = sshll.u32 [#allocation8], 4
      %s63 = int_to_ptr.vmem [resolvable:$true] %s62
      %68 = dma.hbm_to_vmem [thread:$0]  %s61, 8192, %s63, [#allocation9], 256, 256, 16
    $region17: #{tpu_custom_call.1} parent=1 // pred_fallthru
      _
    // Predicated region
    $region18: #{tpu_custom_call.1} parent=1 // pred_check
      _
    $region19: #{tpu_custom_call.1} parent=1 // pred_check_branch
      %70 = sbr.rel (0) target = $region21
    $region20: #{tpu_custom_call.1} parent=1 // pred_region
      %72 = vsyncadd [#allocation9], 0
      %s74 = sshll.u32 %s4, 4
      %s75 = int_to_ptr.hbm [resolvable:$true] %s74
      %s76 = sshll.u32 [#allocation10], 4
      %s77 = int_to_ptr.vmem [resolvable:$true] %s76
      %79 = dma.hbm_to_vmem [thread:$0]  %s75, 64, %s77, [#allocation9]
    $region21: #{tpu_custom_call.1} parent=1 // pred_fallthru
      _
    // Predicated region
    $region22: #{tpu_custom_call.1} parent=1 // pred_check
      _
    $region23: #{tpu_custom_call.1} parent=1 // pred_check_branch
      %81 = sbr.rel (0) target = $region25
    $region24: #{tpu_custom_call.1} parent=1 // pred_region
      %83 = vsyncadd [#allocation12], 0
      %s84 = sshll.u32 %s5, 4
      %s85 = int_to_ptr.hbm [resolvable:$true] %s84
      %s86 = sshll.u32 [#allocation11], 4
      %s87 = int_to_ptr.vmem [resolvable:$true] %s86
      %92 = dma.hbm_to_vmem [thread:$0]  %s85, 8192, %s87, [#allocation12], 128, 128, 8
    $region25: #{tpu_custom_call.1} parent=1 // pred_fallthru
      _
    // Predicated region
    $region26: #{tpu_custom_call.1} parent=1 // pred_check
      _
    $region27: #{tpu_custom_call.1} parent=1 // pred_check_branch
      %94 = sbr.rel (0) target = $region29
    $region28: #{tpu_custom_call.1} parent=1 // pred_region
      _
    $region29: #{tpu_custom_call.1} parent=1 // pred_fallthru
      _
    // Predicated region
    $region30: #{tpu_custom_call.1} parent=1 // pred_check
      _
    $region31: #{tpu_custom_call.1} parent=1 // pred_check_branch
      %96 = sbr.rel (0) target = $region33
    $region32: #{tpu_custom_call.1} parent=1 // pred_region
      %98 = vsyncadd [#allocation12], 0
      %s99 = sshll.u32 %s7, 4
      %s100 = int_to_ptr.hbm [resolvable:$true] %s99
      %s101 = sshll.u32 [#allocation13], 4
      %s102 = int_to_ptr.vmem [resolvable:$true] %s101
      %107 = dma.hbm_to_vmem [thread:$0]  %s100, 4096, %s102, [#allocation12], 128, 128, 8
    $region33: #{tpu_custom_call.1} parent=1 // pred_fallthru
      _
    // Predicated region
    $region34: #{tpu_custom_call.1} parent=1 // pred_check
      _
    $region35: #{tpu_custom_call.1} parent=1 // pred_check_branch
      %109 = sbr.rel (0) target = $region37
    $region36: #{tpu_custom_call.1} parent=1 // pred_region
      _
    $region37: #{tpu_custom_call.1} parent=1 // pred_fallthru
      _
    // Predicated region
    $region38: #{tpu_custom_call.1} parent=1 // pred_check
      _
    $region39: #{tpu_custom_call.1} parent=1 // pred_check_branch
      %111 = sbr.rel (0) target = $region41
    $region40: #{tpu_custom_call.1} parent=1 // pred_region
      %113 = dma.done [#allocation3], 128
    $region41: #{tpu_custom_call.1} parent=1 // pred_fallthru
      _
    // Predicated region
    $region42: #{tpu_custom_call.1} parent=1 // pred_check
      _
    $region43: #{tpu_custom_call.1} parent=1 // pred_check_branch
      %115 = sbr.rel (0) target = $region45
    $region44: #{tpu_custom_call.1} parent=1 // pred_region
      %117 = dma.done [#allocation6], 512
    $region45: #{tpu_custom_call.1} parent=1 // pred_fallthru
      _
    // Predicated region
    $region46: #{tpu_custom_call.1} parent=1 // pred_check
      _
    $region47: #{tpu_custom_call.1} parent=1 // pred_check_branch
      %119 = sbr.rel (0) target = $region49
    $region48: #{tpu_custom_call.1} parent=1 // pred_region
      %121 = dma.done [#allocation6], 32
    $region49: #{tpu_custom_call.1} parent=1 // pred_fallthru
      _
    // Predicated region
    $region50: #{tpu_custom_call.1} parent=1 // pred_check
      _
    $region51: #{tpu_custom_call.1} parent=1 // pred_check_branch
      %123 = sbr.rel (0) target = $region53
    $region52: #{tpu_custom_call.1} parent=1 // pred_region
      %125 = dma.done [#allocation9], 8192
    $region53: #{tpu_custom_call.1} parent=1 // pred_fallthru
      _
    // Predicated region
    $region54: #{tpu_custom_call.1} parent=1 // pred_check
      _
    $region55: #{tpu_custom_call.1} parent=1 // pred_check_branch
      %127 = sbr.rel (0) target = $region57
    $region56: #{tpu_custom_call.1} parent=1 // pred_region
      %129 = dma.done [#allocation9], 64
    $region57: #{tpu_custom_call.1} parent=1 // pred_fallthru
      _
    // Predicated region
    $region58: #{tpu_custom_call.1} parent=1 // pred_check
      _
    $region59: #{tpu_custom_call.1} parent=1 // pred_check_branch
      %131 = sbr.rel (0) target = $region61
    $region60: #{tpu_custom_call.1} parent=1 // pred_region
      %133 = dma.done [#allocation12], 8192
    $region61: #{tpu_custom_call.1} parent=1 // pred_fallthru
      _
    // Predicated region
    $region62: #{tpu_custom_call.1} parent=1 // pred_check
      _
    $region63: #{tpu_custom_call.1} parent=1 // pred_check_branch
      %135 = sbr.rel (0) target = $region65
    $region64: #{tpu_custom_call.1} parent=1 // pred_region
      %137 = dma.done [#allocation12], 4096
    $region65: #{tpu_custom_call.1} parent=1 // pred_fallthru
      _
    %v139 = vld [vmem:[#allocation2] sm:$0xf]
    %v140 = vld [vmem:[#allocation2 + $0x4] sm:$0xf]
    %v141 = vld [vmem:[#allocation5] sm:$0xff]
    %v142 = vld [vmem:[#allocation5 + $0x8] sm:$0xff]
    %v143 = vld [vmem:[#allocation5 + $0x10] sm:$0xff]
    %v144 = vld [vmem:[#allocation5 + $0x18] sm:$0xff]
    %v145 = vld [vmem:[#allocation7] sm:$0x3]
    %v147 = vperm.slane %v145, 0
    %v148 = vperm.slane %v145, 1
    %v153 = vunpack.c.l.b16 %v139
    %v154 = vunpack.c.l.b16 %v140
    %v155 = vpack.c.b16 %v154, %v153
    %v160 = vunpack.c.l.b16 %v141
    %v161 = vunpack.c.h.b16 %v141
    %v162 = vunpack.c.l.b16 %v142
    %v163 = vunpack.c.h.b16 %v142
    %v164 = vunpack.c.l.b16 %v143
    %v165 = vunpack.c.h.b16 %v143
    %v166 = vunpack.c.l.b16 %v144
    %v167 = vunpack.c.h.b16 %v144
    %v168 = vpack.c.b16 %v162, %v160
    %v169 = vpack.c.b16 %v163, %v161
    %v170 = vpack.c.b16 %v166, %v164
    %v171 = vpack.c.b16 %v167, %v165
    %vm176 = vcmask 261120
    %v178 = vsel %vm176, %v155, 0
    %180 = vmatpush.bf16.msra.mxu0 0
    %181 = vmatpush.bf16.msra.mxu0 0
    %182 = vmatpush.bf16.msra.mxu0 0
    %183 = vmatpush.bf16.msra.mxu0 0
    %184 = vmatpush.bf16.msra.mxu0 0
    %185 = vmatpush.bf16.msra.mxu0 0
    %186 = vmatpush.bf16.msra.mxu0 %v170
    %187 = vmatpush.bf16.msra.mxu0 %v168
    %188 = vmatmul.bf16.gmra.mxu0 %v178
    %v189 = vpop.f32.mrf.mxu0
    %v190 = vadd.f32 %v147, %v189
    %v191 = vpop.f32.mrf.mxu0
    %v192 = vadd.f32 %v147, %v191
    %193 = vdwg.mxu0
    %194 = vmatpush.bf16.msra.mxu0 0
    %195 = vmatpush.bf16.msra.mxu0 0
    %196 = vmatpush.bf16.msra.mxu0 0
    %197 = vmatpush.bf16.msra.mxu0 0
    %198 = vmatpush.bf16.msra.mxu0 0
    %199 = vmatpush.bf16.msra.mxu0 0
    %200 = vmatpush.bf16.msra.mxu0 %v171
    %201 = vmatpush.bf16.msra.mxu0 %v169
    %202 = vmatmul.bf16.gmra.mxu0 %v178
    %v203 = vpop.f32.mrf.mxu0
    %v204 = vadd.f32 %v148, %v203
    %v205 = vpop.f32.mrf.mxu0
    %v206 = vadd.f32 %v148, %v205
    %207 = vdwg.mxu0
    %v208 = vpack.c.bf16 %v204, %v190
    %v209 = vpack.c.bf16 %v206, %v192
    %v210 = vunpack.c.l.bf16 %v208
    %v211 = vunpack.c.h.bf16 %v208
    %v212 = vunpack.c.l.bf16 %v209
    %v213 = vunpack.c.h.bf16 %v209
    %v214 = vmax.f32 %v210, 0.0
    %v215 = vmax.f32 %v211, 0.0
    %v216 = vmax.f32 %v212, 0.0
    %v217 = vmax.f32 %v213, 0.0
    %v218 = vpack.c.bf16 %v216, %v214
    %v219 = vpack.c.bf16 %v217, %v215
    %v220 = vld [vmem:[#allocation8] sm:$0xff]
    %v221 = vld [vmem:[#allocation8 + $0x8] sm:$0xff]
    %v222 = vld [vmem:[#allocation8 + $0x10] sm:$0xff]
    %v223 = vld [vmem:[#allocation8 + $0x18] sm:$0xff]
    %v224 = vld [vmem:[#allocation8 + $0x20] sm:$0xff]
    %v225 = vld [vmem:[#allocation8 + $0x28] sm:$0xff]
    %v226 = vld [vmem:[#allocation8 + $0x30] sm:$0xff]
    %v227 = vld [vmem:[#allocation8 + $0x38] sm:$0xff]
    %v228 = vld [vmem:[#allocation8 + $0x40] sm:$0xff]
    %v229 = vld [vmem:[#allocation8 + $0x48] sm:$0xff]
    %v230 = vld [vmem:[#allocation8 + $0x50] sm:$0xff]
    %v231 = vld [vmem:[#allocation8 + $0x58] sm:$0xff]
    %v232 = vld [vmem:[#allocation8 + $0x60] sm:$0xff]
    %v233 = vld [vmem:[#allocation8 + $0x68] sm:$0xff]
    %v234 = vld [vmem:[#allocation8 + $0x70] sm:$0xff]
    %v235 = vld [vmem:[#allocation8 + $0x78] sm:$0xff]
    %v236 = vld [vmem:[#allocation8 + $0x80] sm:$0xff]
    %v237 = vld [vmem:[#allocation8 + $0x88] sm:$0xff]
    %v238 = vld [vmem:[#allocation8 + $0x90] sm:$0xff]
    %v239 = vld [vmem:[#allocation8 + $0x98] sm:$0xff]
    %v240 = vld [vmem:[#allocation8 + $0xa0] sm:$0xff]
    %v241 = vld [vmem:[#allocation8 + $0xa8] sm:$0xff]
    %v242 = vld [vmem:[#allocation8 + $0xb0] sm:$0xff]
    %v243 = vld [vmem:[#allocation8 + $0xb8] sm:$0xff]
    %v244 = vld [vmem:[#allocation8 + $0xc0] sm:$0xff]
    %v245 = vld [vmem:[#allocation8 + $0xc8] sm:$0xff]
    %v246 = vld [vmem:[#allocation8 + $0xd0] sm:$0xff]
    %v247 = vld [vmem:[#allocation8 + $0xd8] sm:$0xff]
    %v248 = vld [vmem:[#allocation8 + $0xe0] sm:$0xff]
    %v249 = vld [vmem:[#allocation8 + $0xe8] sm:$0xff]
    %v250 = vld [vmem:[#allocation8 + $0xf0] sm:$0xff]
    %v251 = vld [vmem:[#allocation8 + $0xf8] sm:$0xff]
    %v252 = vld [vmem:[#allocation8 + $0x100] sm:$0xff]
    %v253 = vld [vmem:[#allocation8 + $0x108] sm:$0xff]
    %v254 = vld [vmem:[#allocation8 + $0x110] sm:$0xff]
    %v255 = vld [vmem:[#allocation8 + $0x118] sm:$0xff]
    %v256 = vld [vmem:[#allocation8 + $0x120] sm:$0xff]
    %v257 = vld [vmem:[#allocation8 + $0x128] sm:$0xff]
    %v258 = vld [vmem:[#allocation8 + $0x130] sm:$0xff]
    %v259 = vld [vmem:[#allocation8 + $0x138] sm:$0xff]
    %v260 = vld [vmem:[#allocation8 + $0x140] sm:$0xff]
    %v261 = vld [vmem:[#allocation8 + $0x148] sm:$0xff]
    %v262 = vld [vmem:[#allocation8 + $0x150] sm:$0xff]
    %v263 = vld [vmem:[#allocation8 + $0x158] sm:$0xff]
    %v264 = vld [vmem:[#allocation8 + $0x160] sm:$0xff]
    %v265 = vld [vmem:[#allocation8 + $0x168] sm:$0xff]
    %v266 = vld [vmem:[#allocation8 + $0x170] sm:$0xff]
    %v267 = vld [vmem:[#allocation8 + $0x178] sm:$0xff]
    %v268 = vld [vmem:[#allocation8 + $0x180] sm:$0xff]
    %v269 = vld [vmem:[#allocation8 + $0x188] sm:$0xff]
    %v270 = vld [vmem:[#allocation8 + $0x190] sm:$0xff]
    %v271 = vld [vmem:[#allocation8 + $0x198] sm:$0xff]
    %v272 = vld [vmem:[#allocation8 + $0x1a0] sm:$0xff]
    %v273 = vld [vmem:[#allocation8 + $0x1a8] sm:$0xff]
    %v274 = vld [vmem:[#allocation8 + $0x1b0] sm:$0xff]
    %v275 = vld [vmem:[#allocation8 + $0x1b8] sm:$0xff]
    %v276 = vld [vmem:[#allocation8 + $0x1c0] sm:$0xff]
    %v277 = vld [vmem:[#allocation8 + $0x1c8] sm:$0xff]
    %v278 = vld [vmem:[#allocation8 + $0x1d0] sm:$0xff]
    %v279 = vld [vmem:[#allocation8 + $0x1d8] sm:$0xff]
    %v280 = vld [vmem:[#allocation8 + $0x1e0] sm:$0xff]
    %v281 = vld [vmem:[#allocation8 + $0x1e8] sm:$0xff]
    %v282 = vld [vmem:[#allocation8 + $0x1f0] sm:$0xff]
    %v283 = vld [vmem:[#allocation8 + $0x1f8] sm:$0xff]
    %v284 = vld [vmem:[#allocation10] sm:$0xf]
    %v286 = vperm.slane %v284, 0
    %v287 = vperm.slane %v284, 1
    %v288 = vperm.slane %v284, 2
    %v289 = vperm.slane %v284, 3
    %v358 = vunpack.c.l.b16 %v220
    %v359 = vunpack.c.h.b16 %v220
    %v360 = vunpack.c.l.b16 %v221
    %v361 = vunpack.c.h.b16 %v221
    %v362 = vunpack.c.l.b16 %v222
    %v363 = vunpack.c.h.b16 %v222
    %v364 = vunpack.c.l.b16 %v223
    %v365 = vunpack.c.h.b16 %v223
    %v366 = vunpack.c.l.b16 %v224
    %v367 = vunpack.c.h.b16 %v224
    %v368 = vunpack.c.l.b16 %v225
    %v369 = vunpack.c.h.b16 %v225
    %v370 = vunpack.c.l.b16 %v226
    %v371 = vunpack.c.h.b16 %v226
    %v372 = vunpack.c.l.b16 %v227
    %v373 = vunpack.c.h.b16 %v227
    %v374 = vunpack.c.l.b16 %v228
    %v375 = vunpack.c.h.b16 %v228
    %v376 = vunpack.c.l.b16 %v229
    %v377 = vunpack.c.h.b16 %v229
    %v378 = vunpack.c.l.b16 %v230
    %v379 = vunpack.c.h.b16 %v230
    %v380 = vunpack.c.l.b16 %v231
    %v381 = vunpack.c.h.b16 %v231
    %v382 = vunpack.c.l.b16 %v232
    %v383 = vunpack.c.h.b16 %v232
    %v384 = vunpack.c.l.b16 %v233
    %v385 = vunpack.c.h.b16 %v233
    %v386 = vunpack.c.l.b16 %v234
    %v387 = vunpack.c.h.b16 %v234
    %v388 = vunpack.c.l.b16 %v235
    %v389 = vunpack.c.h.b16 %v235
    %v390 = vunpack.c.l.b16 %v236
    %v391 = vunpack.c.h.b16 %v236
    %v392 = vunpack.c.l.b16 %v237
    %v393 = vunpack.c.h.b16 %v237
    %v394 = vunpack.c.l.b16 %v238
    %v395 = vunpack.c.h.b16 %v238
    %v396 = vunpack.c.l.b16 %v239
    %v397 = vunpack.c.h.b16 %v239
    %v398 = vunpack.c.l.b16 %v240
    %v399 = vunpack.c.h.b16 %v240
    %v400 = vunpack.c.l.b16 %v241
    %v401 = vunpack.c.h.b16 %v241
    %v402 = vunpack.c.l.b16 %v242
    %v403 = vunpack.c.h.b16 %v242
    %v404 = vunpack.c.l.b16 %v243
    %v405 = vunpack.c.h.b16 %v243
    %v406 = vunpack.c.l.b16 %v244
    %v407 = vunpack.c.h.b16 %v244
    %v408 = vunpack.c.l.b16 %v245
    %v409 = vunpack.c.h.b16 %v245
    %v410 = vunpack.c.l.b16 %v246
    %v411 = vunpack.c.h.b16 %v246
    %v412 = vunpack.c.l.b16 %v247
    %v413 = vunpack.c.h.b16 %v247
    %v414 = vunpack.c.l.b16 %v248
    %v415 = vunpack.c.h.b16 %v248
    %v416 = vunpack.c.l.b16 %v249
    %v417 = vunpack.c.h.b16 %v249
    %v418 = vunpack.c.l.b16 %v250
    %v419 = vunpack.c.h.b16 %v250
    %v420 = vunpack.c.l.b16 %v251
    %v421 = vunpack.c.h.b16 %v251
    %v422 = vunpack.c.l.b16 %v252
    %v423 = vunpack.c.h.b16 %v252
    %v424 = vunpack.c.l.b16 %v253
    %v425 = vunpack.c.h.b16 %v253
    %v426 = vunpack.c.l.b16 %v254
    %v427 = vunpack.c.h.b16 %v254
    %v428 = vunpack.c.l.b16 %v255
    %v429 = vunpack.c.h.b16 %v255
    %v430 = vunpack.c.l.b16 %v256
    %v431 = vunpack.c.h.b16 %v256
    %v432 = vunpack.c.l.b16 %v257
    %v433 = vunpack.c.h.b16 %v257
    %v434 = vunpack.c.l.b16 %v258
    %v435 = vunpack.c.h.b16 %v258
    %v436 = vunpack.c.l.b16 %v259
    %v437 = vunpack.c.h.b16 %v259
    %v438 = vunpack.c.l.b16 %v260
    %v439 = vunpack.c.h.b16 %v260
    %v440 = vunpack.c.l.b16 %v261
    %v441 = vunpack.c.h.b16 %v261
    %v442 = vunpack.c.l.b16 %v262
    %v443 = vunpack.c.h.b16 %v262
    %v444 = vunpack.c.l.b16 %v263
    %v445 = vunpack.c.h.b16 %v263
    %v446 = vunpack.c.l.b16 %v264
    %v447 = vunpack.c.h.b16 %v264
    %v448 = vunpack.c.l.b16 %v265
    %v449 = vunpack.c.h.b16 %v265
    %v450 = vunpack.c.l.b16 %v266
    %v451 = vunpack.c.h.b16 %v266
    %v452 = vunpack.c.l.b16 %v267
    %v453 = vunpack.c.h.b16 %v267
    %v454 = vunpack.c.l.b16 %v268
    %v455 = vunpack.c.h.b16 %v268
    %v456 = vunpack.c.l.b16 %v269
    %v457 = vunpack.c.h.b16 %v269
    %v458 = vunpack.c.l.b16 %v270
    %v459 = vunpack.c.h.b16 %v270
    %v460 = vunpack.c.l.b16 %v271
    %v461 = vunpack.c.h.b16 %v271
    %v462 = vunpack.c.l.b16 %v272
    %v463 = vunpack.c.h.b16 %v272
    %v464 = vunpack.c.l.b16 %v273
    %v465 = vunpack.c.h.b16 %v273
    %v466 = vunpack.c.l.b16 %v274
    %v467 = vunpack.c.h.b16 %v274
    %v468 = vunpack.c.l.b16 %v275
    %v469 = vunpack.c.h.b16 %v275
    %v470 = vunpack.c.l.b16 %v276
    %v471 = vunpack.c.h.b16 %v276
    %v472 = vunpack.c.l.b16 %v277
    %v473 = vunpack.c.h.b16 %v277
    %v474 = vunpack.c.l.b16 %v278
    %v475 = vunpack.c.h.b16 %v278
    %v476 = vunpack.c.l.b16 %v279
    %v477 = vunpack.c.h.b16 %v279
    %v478 = vunpack.c.l.b16 %v280
    %v479 = vunpack.c.h.b16 %v280
    %v480 = vunpack.c.l.b16 %v281
    %v481 = vunpack.c.h.b16 %v281
    %v482 = vunpack.c.l.b16 %v282
    %v483 = vunpack.c.h.b16 %v282
    %v484 = vunpack.c.l.b16 %v283
    %v485 = vunpack.c.h.b16 %v283
    %v486 = vpack.c.b16 %v362, %v358
    %v487 = vpack.c.b16 %v363, %v359
    %v488 = vpack.c.b16 %v364, %v360
    %v489 = vpack.c.b16 %v365, %v361
    %v490 = vpack.c.b16 %v370, %v366
    %v491 = vpack.c.b16 %v371, %v367
    %v492 = vpack.c.b16 %v372, %v368
    %v493 = vpack.c.b16 %v373, %v369
    %v494 = vpack.c.b16 %v378, %v374
    %v495 = vpack.c.b16 %v379, %v375
    %v496 = vpack.c.b16 %v380, %v376
    %v497 = vpack.c.b16 %v381, %v377
    %v498 = vpack.c.b16 %v386, %v382
    %v499 = vpack.c.b16 %v387, %v383
    %v500 = vpack.c.b16 %v388, %v384
    %v501 = vpack.c.b16 %v389, %v385
    %v502 = vpack.c.b16 %v394, %v390
    %v503 = vpack.c.b16 %v395, %v391
    %v504 = vpack.c.b16 %v396, %v392
    %v505 = vpack.c.b16 %v397, %v393
    %v506 = vpack.c.b16 %v402, %v398
    %v507 = vpack.c.b16 %v403, %v399
    %v508 = vpack.c.b16 %v404, %v400
    %v509 = vpack.c.b16 %v405, %v401
    %v510 = vpack.c.b16 %v410, %v406
    %v511 = vpack.c.b16 %v411, %v407
    %v512 = vpack.c.b16 %v412, %v408
    %v513 = vpack.c.b16 %v413, %v409
    %v514 = vpack.c.b16 %v418, %v414
    %v515 = vpack.c.b16 %v419, %v415
    %v516 = vpack.c.b16 %v420, %v416
    %v517 = vpack.c.b16 %v421, %v417
    %v518 = vpack.c.b16 %v426, %v422
    %v519 = vpack.c.b16 %v427, %v423
    %v520 = vpack.c.b16 %v428, %v424
    %v521 = vpack.c.b16 %v429, %v425
    %v522 = vpack.c.b16 %v434, %v430
    %v523 = vpack.c.b16 %v435, %v431
    %v524 = vpack.c.b16 %v436, %v432
    %v525 = vpack.c.b16 %v437, %v433
    %v526 = vpack.c.b16 %v442, %v438
    %v527 = vpack.c.b16 %v443, %v439
    %v528 = vpack.c.b16 %v444, %v440
    %v529 = vpack.c.b16 %v445, %v441
    %v530 = vpack.c.b16 %v450, %v446
    %v531 = vpack.c.b16 %v451, %v447
    %v532 = vpack.c.b16 %v452, %v448
    %v533 = vpack.c.b16 %v453, %v449
    %v534 = vpack.c.b16 %v458, %v454
    %v535 = vpack.c.b16 %v459, %v455
    %v536 = vpack.c.b16 %v460, %v456
    %v537 = vpack.c.b16 %v461, %v457
    %v538 = vpack.c.b16 %v466, %v462
    %v539 = vpack.c.b16 %v467, %v463
    %v540 = vpack.c.b16 %v468, %v464
    %v541 = vpack.c.b16 %v469, %v465
    %v542 = vpack.c.b16 %v474, %v470
    %v543 = vpack.c.b16 %v475, %v471
    %v544 = vpack.c.b16 %v476, %v472
    %v545 = vpack.c.b16 %v477, %v473
    %v546 = vpack.c.b16 %v482, %v478
    %v547 = vpack.c.b16 %v483, %v479
    %v548 = vpack.c.b16 %v484, %v480
    %v549 = vpack.c.b16 %v485, %v481
    %614 = vmatpush.bf16.msra.mxu0 %v514
    %615 = vmatpush.bf16.msra.mxu0 %v510
    %616 = vmatpush.bf16.msra.mxu0 %v506
    %617 = vmatpush.bf16.msra.mxu0 %v502
    %618 = vmatpush.bf16.msra.mxu0 %v498
    %619 = vmatpush.bf16.msra.mxu0 %v494
    %620 = vmatpush.bf16.msra.mxu0 %v490
    %621 = vmatpush.bf16.msra.mxu0 %v486
    %622 = vmatmul.bf16.gmra.mxu0 %v218
    %v623 = vpop.f32.mrf.mxu0
    %v624 = vadd.f32 %v286, %v623
    %v625 = vpop.f32.mrf.mxu0
    %v626 = vadd.f32 %v286, %v625
    %627 = vdwg.mxu0
    %628 = vmatpush.bf16.msra.mxu0 %v546
    %629 = vmatpush.bf16.msra.mxu0 %v542
    %630 = vmatpush.bf16.msra.mxu0 %v538
    %631 = vmatpush.bf16.msra.mxu0 %v534
    %632 = vmatpush.bf16.msra.mxu0 %v530
    %633 = vmatpush.bf16.msra.mxu0 %v526
    %634 = vmatpush.bf16.msra.mxu0 %v522
    %635 = vmatpush.bf16.msra.mxu0 %v518
    %636 = vmatmul.bf16.gmra.mxu0 %v219
    %v637 = vpop.f32.mrf.mxu0
    %v638 = vadd.f32 %v624, %v637
    %v639 = vpop.f32.mrf.mxu0
    %v640 = vadd.f32 %v626, %v639
    %641 = vdwg.mxu0
    %642 = vmatpush.bf16.msra.mxu0 %v515
    %643 = vmatpush.bf16.msra.mxu0 %v511
    %644 = vmatpush.bf16.msra.mxu0 %v507
    %645 = vmatpush.bf16.msra.mxu0 %v503
    %646 = vmatpush.bf16.msra.mxu0 %v499
    %647 = vmatpush.bf16.msra.mxu0 %v495
    %648 = vmatpush.bf16.msra.mxu0 %v491
    %649 = vmatpush.bf16.msra.mxu0 %v487
    %650 = vmatmul.bf16.gmra.mxu0 %v218
    %v651 = vpop.f32.mrf.mxu0
    %v652 = vadd.f32 %v287, %v651
    %v653 = vpop.f32.mrf.mxu0
    %v654 = vadd.f32 %v287, %v653
    %655 = vdwg.mxu0
    %656 = vmatpush.bf16.msra.mxu0 %v547
    %657 = vmatpush.bf16.msra.mxu0 %v543
    %658 = vmatpush.bf16.msra.mxu0 %v539
    %659 = vmatpush.bf16.msra.mxu0 %v535
    %660 = vmatpush.bf16.msra.mxu0 %v531
    %661 = vmatpush.bf16.msra.mxu0 %v527
    %662 = vmatpush.bf16.msra.mxu0 %v523
    %663 = vmatpush.bf16.msra.mxu0 %v519
    %664 = vmatmul.bf16.gmra.mxu0 %v219
    %v665 = vpop.f32.mrf.mxu0
    %v666 = vadd.f32 %v652, %v665
    %v667 = vpop.f32.mrf.mxu0
    %v668 = vadd.f32 %v654, %v667
    %669 = vdwg.mxu0
    %670 = vmatpush.bf16.msra.mxu0 %v516
    %671 = vmatpush.bf16.msra.mxu0 %v512
    %672 = vmatpush.bf16.msra.mxu0 %v508
    %673 = vmatpush.bf16.msra.mxu0 %v504
    %674 = vmatpush.bf16.msra.mxu0 %v500
    %675 = vmatpush.bf16.msra.mxu0 %v496
    %676 = vmatpush.bf16.msra.mxu0 %v492
    %677 = vmatpush.bf16.msra.mxu0 %v488
    %678 = vmatmul.bf16.gmra.mxu0 %v218
    %v679 = vpop.f32.mrf.mxu0
    %v680 = vadd.f32 %v288, %v679
    %v681 = vpop.f32.mrf.mxu0
    %v682 = vadd.f32 %v288, %v681
    %683 = vdwg.mxu0
    %684 = vmatpush.bf16.msra.mxu0 %v548
    %685 = vmatpush.bf16.msra.mxu0 %v544
    %686 = vmatpush.bf16.msra.mxu0 %v540
    %687 = vmatpush.bf16.msra.mxu0 %v536
    %688 = vmatpush.bf16.msra.mxu0 %v532
    %689 = vmatpush.bf16.msra.mxu0 %v528
    %690 = vmatpush.bf16.msra.mxu0 %v524
    %691 = vmatpush.bf16.msra.mxu0 %v520
    %692 = vmatmul.bf16.gmra.mxu0 %v219
    %v693 = vpop.f32.mrf.mxu0
    %v694 = vadd.f32 %v680, %v693
    %v695 = vpop.f32.mrf.mxu0
    %v696 = vadd.f32 %v682, %v695
    %697 = vdwg.mxu0
    %698 = vmatpush.bf16.msra.mxu0 %v517
    %699 = vmatpush.bf16.msra.mxu0 %v513
    %700 = vmatpush.bf16.msra.mxu0 %v509
    %701 = vmatpush.bf16.msra.mxu0 %v505
    %702 = vmatpush.bf16.msra.mxu0 %v501
    %703 = vmatpush.bf16.msra.mxu0 %v497
    %704 = vmatpush.bf16.msra.mxu0 %v493
    %705 = vmatpush.bf16.msra.mxu0 %v489
    %706 = vmatmul.bf16.gmra.mxu0 %v218
    %v707 = vpop.f32.mrf.mxu0
    %v708 = vadd.f32 %v289, %v707
    %v709 = vpop.f32.mrf.mxu0
    %v710 = vadd.f32 %v289, %v709
    %711 = vdwg.mxu0
    %712 = vmatpush.bf16.msra.mxu0 %v549
    %713 = vmatpush.bf16.msra.mxu0 %v545
    %714 = vmatpush.bf16.msra.mxu0 %v541
    %715 = vmatpush.bf16.msra.mxu0 %v537
    %716 = vmatpush.bf16.msra.mxu0 %v533
    %717 = vmatpush.bf16.msra.mxu0 %v529
    %718 = vmatpush.bf16.msra.mxu0 %v525
    %719 = vmatpush.bf16.msra.mxu0 %v521
    %720 = vmatmul.bf16.gmra.mxu0 %v219
    %v721 = vpop.f32.mrf.mxu0
    %v722 = vadd.f32 %v708, %v721
    %v723 = vpop.f32.mrf.mxu0
    %v724 = vadd.f32 %v710, %v723
    %725 = vdwg.mxu0
    %v726 = vpack.c.bf16 %v666, %v638
    %v727 = vpack.c.bf16 %v722, %v694
    %v728 = vpack.c.bf16 %v668, %v640
    %v729 = vpack.c.bf16 %v724, %v696
    %v730 = vunpack.c.l.bf16 %v726
    %v731 = vunpack.c.h.bf16 %v726
    %v732 = vunpack.c.l.bf16 %v727
    %v733 = vunpack.c.h.bf16 %v727
    %v734 = vunpack.c.l.bf16 %v728
    %v735 = vunpack.c.h.bf16 %v728
    %v736 = vunpack.c.l.bf16 %v729
    %v737 = vunpack.c.h.bf16 %v729
    %v738 = vmax.f32 %v730, 0.0
    %v739 = vmax.f32 %v731, 0.0
    %v740 = vmax.f32 %v732, 0.0
    %v741 = vmax.f32 %v733, 0.0
    %v742 = vmax.f32 %v734, 0.0
    %v743 = vmax.f32 %v735, 0.0
    %v744 = vmax.f32 %v736, 0.0
    %v745 = vmax.f32 %v737, 0.0
    %v746 = vpack.c.bf16 %v742, %v738
    %v747 = vpack.c.bf16 %v743, %v739
    %v748 = vpack.c.bf16 %v744, %v740
    %v749 = vpack.c.bf16 %v745, %v741
    %v750 = vld [vmem:[#allocation11] sm:$0xff]
    %v751 = vld [vmem:[#allocation11 + $0x8] sm:$0xff]
    %v752 = vld [vmem:[#allocation11 + $0x10] sm:$0xff]
    %v753 = vld [vmem:[#allocation11 + $0x18] sm:$0xff]
    %v754 = vld [vmem:[#allocation11 + $0x20] sm:$0xff]
    %v755 = vld [vmem:[#allocation11 + $0x28] sm:$0xff]
    %v756 = vld [vmem:[#allocation11 + $0x30] sm:$0xff]
    %v757 = vld [vmem:[#allocation11 + $0x38] sm:$0xff]
    %v758 = vld [vmem:[#allocation11 + $0x40] sm:$0xff]
    %v759 = vld [vmem:[#allocation11 + $0x48] sm:$0xff]
    %v760 = vld [vmem:[#allocation11 + $0x50] sm:$0xff]
    %v761 = vld [vmem:[#allocation11 + $0x58] sm:$0xff]
    %v762 = vld [vmem:[#allocation11 + $0x60] sm:$0xff]
    %v763 = vld [vmem:[#allocation11 + $0x68] sm:$0xff]
    %v764 = vld [vmem:[#allocation11 + $0x70] sm:$0xff]
    %v765 = vld [vmem:[#allocation11 + $0x78] sm:$0xff]
    %v766 = vld [vmem:[#allocation11 + $0x80] sm:$0xff]
    %v767 = vld [vmem:[#allocation11 + $0x88] sm:$0xff]
    %v768 = vld [vmem:[#allocation11 + $0x90] sm:$0xff]
    %v769 = vld [vmem:[#allocation11 + $0x98] sm:$0xff]
    %v770 = vld [vmem:[#allocation11 + $0xa0] sm:$0xff]
    %v771 = vld [vmem:[#allocation11 + $0xa8] sm:$0xff]
    %v772 = vld [vmem:[#allocation11 + $0xb0] sm:$0xff]
    %v773 = vld [vmem:[#allocation11 + $0xb8] sm:$0xff]
    %v774 = vld [vmem:[#allocation11 + $0xc0] sm:$0xff]
    %v775 = vld [vmem:[#allocation11 + $0xc8] sm:$0xff]
    %v776 = vld [vmem:[#allocation11 + $0xd0] sm:$0xff]
    %v777 = vld [vmem:[#allocation11 + $0xd8] sm:$0xff]
    %v778 = vld [vmem:[#allocation11 + $0xe0] sm:$0xff]
    %v779 = vld [vmem:[#allocation11 + $0xe8] sm:$0xff]
    %v780 = vld [vmem:[#allocation11 + $0xf0] sm:$0xff]
    %v781 = vld [vmem:[#allocation11 + $0xf8] sm:$0xff]
    %v782 = vld [vmem:[#allocation11 + $0x100] sm:$0xff]
    %v783 = vld [vmem:[#allocation11 + $0x108] sm:$0xff]
    %v784 = vld [vmem:[#allocation11 + $0x110] sm:$0xff]
    %v785 = vld [vmem:[#allocation11 + $0x118] sm:$0xff]
    %v786 = vld [vmem:[#allocation11 + $0x120] sm:$0xff]
    %v787 = vld [vmem:[#allocation11 + $0x128] sm:$0xff]
    %v788 = vld [vmem:[#allocation11 + $0x130] sm:$0xff]
    %v789 = vld [vmem:[#allocation11 + $0x138] sm:$0xff]
    %v790 = vld [vmem:[#allocation11 + $0x140] sm:$0xff]
    %v791 = vld [vmem:[#allocation11 + $0x148] sm:$0xff]
    %v792 = vld [vmem:[#allocation11 + $0x150] sm:$0xff]
    %v793 = vld [vmem:[#allocation11 + $0x158] sm:$0xff]
    %v794 = vld [vmem:[#allocation11 + $0x160] sm:$0xff]
    %v795 = vld [vmem:[#allocation11 + $0x168] sm:$0xff]
    %v796 = vld [vmem:[#allocation11 + $0x170] sm:$0xff]
    %v797 = vld [vmem:[#allocation11 + $0x178] sm:$0xff]
    %v798 = vld [vmem:[#allocation11 + $0x180] sm:$0xff]
    %v799 = vld [vmem:[#allocation11 + $0x188] sm:$0xff]
    %v800 = vld [vmem:[#allocation11 + $0x190] sm:$0xff]
    %v801 = vld [vmem:[#allocation11 + $0x198] sm:$0xff]
    %v802 = vld [vmem:[#allocation11 + $0x1a0] sm:$0xff]
    %v803 = vld [vmem:[#allocation11 + $0x1a8] sm:$0xff]
    %v804 = vld [vmem:[#allocation11 + $0x1b0] sm:$0xff]
    %v805 = vld [vmem:[#allocation11 + $0x1b8] sm:$0xff]
    %v806 = vld [vmem:[#allocation11 + $0x1c0] sm:$0xff]
    %v807 = vld [vmem:[#allocation11 + $0x1c8] sm:$0xff]
    %v808 = vld [vmem:[#allocation11 + $0x1d0] sm:$0xff]
    %v809 = vld [vmem:[#allocation11 + $0x1d8] sm:$0xff]
    %v810 = vld [vmem:[#allocation11 + $0x1e0] sm:$0xff]
    %v811 = vld [vmem:[#allocation11 + $0x1e8] sm:$0xff]
    %v812 = vld [vmem:[#allocation11 + $0x1f0] sm:$0xff]
    %v813 = vld [vmem:[#allocation11 + $0x1f8] sm:$0xff]
    %v814 = vld [vmem:[%s6] sm:$0x3]
    %v816 = vperm.slane %v814, 0
    %v817 = vperm.slane %v814, 1
    %v884 = vunpack.c.l.b16 %v750
    %v885 = vunpack.c.h.b16 %v750
    %v886 = vunpack.c.l.b16 %v751
    %v887 = vunpack.c.h.b16 %v751
    %v888 = vunpack.c.l.b16 %v752
    %v889 = vunpack.c.h.b16 %v752
    %v890 = vunpack.c.l.b16 %v753
    %v891 = vunpack.c.h.b16 %v753
    %v892 = vunpack.c.l.b16 %v754
    %v893 = vunpack.c.h.b16 %v754
    %v894 = vunpack.c.l.b16 %v755
    %v895 = vunpack.c.h.b16 %v755
    %v896 = vunpack.c.l.b16 %v756
    %v897 = vunpack.c.h.b16 %v756
    %v898 = vunpack.c.l.b16 %v757
    %v899 = vunpack.c.h.b16 %v757
    %v900 = vunpack.c.l.b16 %v758
    %v901 = vunpack.c.h.b16 %v758
    %v902 = vunpack.c.l.b16 %v759
    %v903 = vunpack.c.h.b16 %v759
    %v904 = vunpack.c.l.b16 %v760
    %v905 = vunpack.c.h.b16 %v760
    %v906 = vunpack.c.l.b16 %v761
    %v907 = vunpack.c.h.b16 %v761
    %v908 = vunpack.c.l.b16 %v762
    %v909 = vunpack.c.h.b16 %v762
    %v910 = vunpack.c.l.b16 %v763
    %v911 = vunpack.c.h.b16 %v763
    %v912 = vunpack.c.l.b16 %v764
    %v913 = vunpack.c.h.b16 %v764
    %v914 = vunpack.c.l.b16 %v765
    %v915 = vunpack.c.h.b16 %v765
    %v916 = vunpack.c.l.b16 %v766
    %v917 = vunpack.c.h.b16 %v766
    %v918 = vunpack.c.l.b16 %v767
    %v919 = vunpack.c.h.b16 %v767
    %v920 = vunpack.c.l.b16 %v768
    %v921 = vunpack.c.h.b16 %v768
    %v922 = vunpack.c.l.b16 %v769
    %v923 = vunpack.c.h.b16 %v769
    %v924 = vunpack.c.l.b16 %v770
    %v925 = vunpack.c.h.b16 %v770
    %v926 = vunpack.c.l.b16 %v771
    %v927 = vunpack.c.h.b16 %v771
    %v928 = vunpack.c.l.b16 %v772
    %v929 = vunpack.c.h.b16 %v772
    %v930 = vunpack.c.l.b16 %v773
    %v931 = vunpack.c.h.b16 %v773
    %v932 = vunpack.c.l.b16 %v774
    %v933 = vunpack.c.h.b16 %v774
    %v934 = vunpack.c.l.b16 %v775
    %v935 = vunpack.c.h.b16 %v775
    %v936 = vunpack.c.l.b16 %v776
    %v937 = vunpack.c.h.b16 %v776
    %v938 = vunpack.c.l.b16 %v777
    %v939 = vunpack.c.h.b16 %v777
    %v940 = vunpack.c.l.b16 %v778
    %v941 = vunpack.c.h.b16 %v778
    %v942 = vunpack.c.l.b16 %v779
    %v943 = vunpack.c.h.b16 %v779
    %v944 = vunpack.c.l.b16 %v780
    %v945 = vunpack.c.h.b16 %v780
    %v946 = vunpack.c.l.b16 %v781
    %v947 = vunpack.c.h.b16 %v781
    %v948 = vunpack.c.l.b16 %v782
    %v949 = vunpack.c.h.b16 %v782
    %v950 = vunpack.c.l.b16 %v783
    %v951 = vunpack.c.h.b16 %v783
    %v952 = vunpack.c.l.b16 %v784
    %v953 = vunpack.c.h.b16 %v784
    %v954 = vunpack.c.l.b16 %v785
    %v955 = vunpack.c.h.b16 %v785
    %v956 = vunpack.c.l.b16 %v786
    %v957 = vunpack.c.h.b16 %v786
    %v958 = vunpack.c.l.b16 %v787
    %v959 = vunpack.c.h.b16 %v787
    %v960 = vunpack.c.l.b16 %v788
    %v961 = vunpack.c.h.b16 %v788
    %v962 = vunpack.c.l.b16 %v789
    %v963 = vunpack.c.h.b16 %v789
    %v964 = vunpack.c.l.b16 %v790
    %v965 = vunpack.c.h.b16 %v790
    %v966 = vunpack.c.l.b16 %v791
    %v967 = vunpack.c.h.b16 %v791
    %v968 = vunpack.c.l.b16 %v792
    %v969 = vunpack.c.h.b16 %v792
    %v970 = vunpack.c.l.b16 %v793
    %v971 = vunpack.c.h.b16 %v793
    %v972 = vunpack.c.l.b16 %v794
    %v973 = vunpack.c.h.b16 %v794
    %v974 = vunpack.c.l.b16 %v795
    %v975 = vunpack.c.h.b16 %v795
    %v976 = vunpack.c.l.b16 %v796
    %v977 = vunpack.c.h.b16 %v796
    %v978 = vunpack.c.l.b16 %v797
    %v979 = vunpack.c.h.b16 %v797
    %v980 = vunpack.c.l.b16 %v798
    %v981 = vunpack.c.h.b16 %v798
    %v982 = vunpack.c.l.b16 %v799
    %v983 = vunpack.c.h.b16 %v799
    %v984 = vunpack.c.l.b16 %v800
    %v985 = vunpack.c.h.b16 %v800
    %v986 = vunpack.c.l.b16 %v801
    %v987 = vunpack.c.h.b16 %v801
    %v988 = vunpack.c.l.b16 %v802
    %v989 = vunpack.c.h.b16 %v802
    %v990 = vunpack.c.l.b16 %v803
    %v991 = vunpack.c.h.b16 %v803
    %v992 = vunpack.c.l.b16 %v804
    %v993 = vunpack.c.h.b16 %v804
    %v994 = vunpack.c.l.b16 %v805
    %v995 = vunpack.c.h.b16 %v805
    %v996 = vunpack.c.l.b16 %v806
    %v997 = vunpack.c.h.b16 %v806
    %v998 = vunpack.c.l.b16 %v807
    %v999 = vunpack.c.h.b16 %v807
    %v1000 = vunpack.c.l.b16 %v808
    %v1001 = vunpack.c.h.b16 %v808
    %v1002 = vunpack.c.l.b16 %v809
    %v1003 = vunpack.c.h.b16 %v809
    %v1004 = vunpack.c.l.b16 %v810
    %v1005 = vunpack.c.h.b16 %v810
    %v1006 = vunpack.c.l.b16 %v811
    %v1007 = vunpack.c.h.b16 %v811
    %v1008 = vunpack.c.l.b16 %v812
    %v1009 = vunpack.c.h.b16 %v812
    %v1010 = vunpack.c.l.b16 %v813
    %v1011 = vunpack.c.h.b16 %v813
    %v1012 = vpack.c.b16 %v886, %v884
    %v1013 = vpack.c.b16 %v887, %v885
    %v1014 = vpack.c.b16 %v890, %v888
    %v1015 = vpack.c.b16 %v891, %v889
    %v1016 = vpack.c.b16 %v894, %v892
    %v1017 = vpack.c.b16 %v895, %v893
    %v1018 = vpack.c.b16 %v898, %v896
    %v1019 = vpack.c.b16 %v899, %v897
    %v1020 = vpack.c.b16 %v902, %v900
    %v1021 = vpack.c.b16 %v903, %v901
    %v1022 = vpack.c.b16 %v906, %v904
    %v1023 = vpack.c.b16 %v907, %v905
    %v1024 = vpack.c.b16 %v910, %v908
    %v1025 = vpack.c.b16 %v911, %v909
    %v1026 = vpack.c.b16 %v914, %v912
    %v1027 = vpack.c.b16 %v915, %v913
    %v1028 = vpack.c.b16 %v918, %v916
    %v1029 = vpack.c.b16 %v919, %v917
    %v1030 = vpack.c.b16 %v922, %v920
    %v1031 = vpack.c.b16 %v923, %v921
    %v1032 = vpack.c.b16 %v926, %v924
    %v1033 = vpack.c.b16 %v927, %v925
    %v1034 = vpack.c.b16 %v930, %v928
    %v1035 = vpack.c.b16 %v931, %v929
    %v1036 = vpack.c.b16 %v934, %v932
    %v1037 = vpack.c.b16 %v935, %v933
    %v1038 = vpack.c.b16 %v938, %v936
    %v1039 = vpack.c.b16 %v939, %v937
    %v1040 = vpack.c.b16 %v942, %v940
    %v1041 = vpack.c.b16 %v943, %v941
    %v1042 = vpack.c.b16 %v946, %v944
    %v1043 = vpack.c.b16 %v947, %v945
    %v1044 = vpack.c.b16 %v950, %v948
    %v1045 = vpack.c.b16 %v951, %v949
    %v1046 = vpack.c.b16 %v954, %v952
    %v1047 = vpack.c.b16 %v955, %v953
    %v1048 = vpack.c.b16 %v958, %v956
    %v1049 = vpack.c.b16 %v959, %v957
    %v1050 = vpack.c.b16 %v962, %v960
    %v1051 = vpack.c.b16 %v963, %v961
    %v1052 = vpack.c.b16 %v966, %v964
    %v1053 = vpack.c.b16 %v967, %v965
    %v1054 = vpack.c.b16 %v970, %v968
    %v1055 = vpack.c.b16 %v971, %v969
    %v1056 = vpack.c.b16 %v974, %v972
    %v1057 = vpack.c.b16 %v975, %v973
    %v1058 = vpack.c.b16 %v978, %v976
    %v1059 = vpack.c.b16 %v979, %v977
    %v1060 = vpack.c.b16 %v982, %v980
    %v1061 = vpack.c.b16 %v983, %v981
    %v1062 = vpack.c.b16 %v986, %v984
    %v1063 = vpack.c.b16 %v987, %v985
    %v1064 = vpack.c.b16 %v990, %v988
    %v1065 = vpack.c.b16 %v991, %v989
    %v1066 = vpack.c.b16 %v994, %v992
    %v1067 = vpack.c.b16 %v995, %v993
    %v1068 = vpack.c.b16 %v998, %v996
    %v1069 = vpack.c.b16 %v999, %v997
    %v1070 = vpack.c.b16 %v1002, %v1000
    %v1071 = vpack.c.b16 %v1003, %v1001
    %v1072 = vpack.c.b16 %v1006, %v1004
    %v1073 = vpack.c.b16 %v1007, %v1005
    %v1074 = vpack.c.b16 %v1010, %v1008
    %v1075 = vpack.c.b16 %v1011, %v1009
    %1140 = vmatpush.bf16.msra.mxu0 %v1026
    %1141 = vmatpush.bf16.msra.mxu0 %v1024
    %1142 = vmatpush.bf16.msra.mxu0 %v1022
    %1143 = vmatpush.bf16.msra.mxu0 %v1020
    %1144 = vmatpush.bf16.msra.mxu0 %v1018
    %1145 = vmatpush.bf16.msra.mxu0 %v1016
    %1146 = vmatpush.bf16.msra.mxu0 %v1014
    %1147 = vmatpush.bf16.msra.mxu0 %v1012
    %1148 = vmatmul.bf16.gmra.mxu0 %v746
    %v1149 = vpop.f32.mrf.mxu0
    %v1150 = vadd.f32 %v816, %v1149
    %v1151 = vpop.f32.mrf.mxu0
    %v1152 = vadd.f32 %v816, %v1151
    %1153 = vdwg.mxu0
    %1154 = vmatpush.bf16.msra.mxu0 %v1042
    %1155 = vmatpush.bf16.msra.mxu0 %v1040
    %1156 = vmatpush.bf16.msra.mxu0 %v1038
    %1157 = vmatpush.bf16.msra.mxu0 %v1036
    %1158 = vmatpush.bf16.msra.mxu0 %v1034
    %1159 = vmatpush.bf16.msra.mxu0 %v1032
    %1160 = vmatpush.bf16.msra.mxu0 %v1030
    %1161 = vmatpush.bf16.msra.mxu0 %v1028
    %1162 = vmatmul.bf16.gmra.mxu0 %v747
    %v1163 = vpop.f32.mrf.mxu0
    %v1164 = vadd.f32 %v1150, %v1163
    %v1165 = vpop.f32.mrf.mxu0
    %v1166 = vadd.f32 %v1152, %v1165
    %1167 = vdwg.mxu0
    %1168 = vmatpush.bf16.msra.mxu0 %v1058
    %1169 = vmatpush.bf16.msra.mxu0 %v1056
    %1170 = vmatpush.bf16.msra.mxu0 %v1054
    %1171 = vmatpush.bf16.msra.mxu0 %v1052
    %1172 = vmatpush.bf16.msra.mxu0 %v1050
    %1173 = vmatpush.bf16.msra.mxu0 %v1048
    %1174 = vmatpush.bf16.msra.mxu0 %v1046
    %1175 = vmatpush.bf16.msra.mxu0 %v1044
    %1176 = vmatmul.bf16.gmra.mxu0 %v748
    %v1177 = vpop.f32.mrf.mxu0
    %v1178 = vadd.f32 %v1164, %v1177
    %v1179 = vpop.f32.mrf.mxu0
    %v1180 = vadd.f32 %v1166, %v1179
    %1181 = vdwg.mxu0
    %1182 = vmatpush.bf16.msra.mxu0 %v1074
    %1183 = vmatpush.bf16.msra.mxu0 %v1072
    %1184 = vmatpush.bf16.msra.mxu0 %v1070
    %1185 = vmatpush.bf16.msra.mxu0 %v1068
    %1186 = vmatpush.bf16.msra.mxu0 %v1066
    %1187 = vmatpush.bf16.msra.mxu0 %v1064
    %1188 = vmatpush.bf16.msra.mxu0 %v1062
    %1189 = vmatpush.bf16.msra.mxu0 %v1060
    %1190 = vmatmul.bf16.gmra.mxu0 %v749
    %v1191 = vpop.f32.mrf.mxu0
    %v1192 = vadd.f32 %v1178, %v1191
    %v1193 = vpop.f32.mrf.mxu0
    %v1194 = vadd.f32 %v1180, %v1193
    %1195 = vdwg.mxu0
    %1196 = vmatpush.bf16.msra.mxu0 %v1027
    %1197 = vmatpush.bf16.msra.mxu0 %v1025
    %1198 = vmatpush.bf16.msra.mxu0 %v1023
    %1199 = vmatpush.bf16.msra.mxu0 %v1021
    %1200 = vmatpush.bf16.msra.mxu0 %v1019
    %1201 = vmatpush.bf16.msra.mxu0 %v1017
    %1202 = vmatpush.bf16.msra.mxu0 %v1015
    %1203 = vmatpush.bf16.msra.mxu0 %v1013
    %1204 = vmatmul.bf16.gmra.mxu0 %v746
    %v1205 = vpop.f32.mrf.mxu0
    %v1206 = vadd.f32 %v817, %v1205
    %v1207 = vpop.f32.mrf.mxu0
    %v1208 = vadd.f32 %v817, %v1207
    %1209 = vdwg.mxu0
    %1210 = vmatpush.bf16.msra.mxu0 %v1043
    %1211 = vmatpush.bf16.msra.mxu0 %v1041
    %1212 = vmatpush.bf16.msra.mxu0 %v1039
    %1213 = vmatpush.bf16.msra.mxu0 %v1037
    %1214 = vmatpush.bf16.msra.mxu0 %v1035
    %1215 = vmatpush.bf16.msra.mxu0 %v1033
    %1216 = vmatpush.bf16.msra.mxu0 %v1031
    %1217 = vmatpush.bf16.msra.mxu0 %v1029
    %1218 = vmatmul.bf16.gmra.mxu0 %v747
    %v1219 = vpop.f32.mrf.mxu0
    %v1220 = vadd.f32 %v1206, %v1219
    %v1221 = vpop.f32.mrf.mxu0
    %v1222 = vadd.f32 %v1208, %v1221
    %1223 = vdwg.mxu0
    %1224 = vmatpush.bf16.msra.mxu0 %v1059
    %1225 = vmatpush.bf16.msra.mxu0 %v1057
    %1226 = vmatpush.bf16.msra.mxu0 %v1055
    %1227 = vmatpush.bf16.msra.mxu0 %v1053
    %1228 = vmatpush.bf16.msra.mxu0 %v1051
    %1229 = vmatpush.bf16.msra.mxu0 %v1049
    %1230 = vmatpush.bf16.msra.mxu0 %v1047
    %1231 = vmatpush.bf16.msra.mxu0 %v1045
    %1232 = vmatmul.bf16.gmra.mxu0 %v748
    %v1233 = vpop.f32.mrf.mxu0
    %v1234 = vadd.f32 %v1220, %v1233
    %v1235 = vpop.f32.mrf.mxu0
    %v1236 = vadd.f32 %v1222, %v1235
    %1237 = vdwg.mxu0
    %1238 = vmatpush.bf16.msra.mxu0 %v1075
    %1239 = vmatpush.bf16.msra.mxu0 %v1073
    %1240 = vmatpush.bf16.msra.mxu0 %v1071
    %1241 = vmatpush.bf16.msra.mxu0 %v1069
    %1242 = vmatpush.bf16.msra.mxu0 %v1067
    %1243 = vmatpush.bf16.msra.mxu0 %v1065
    %1244 = vmatpush.bf16.msra.mxu0 %v1063
    %1245 = vmatpush.bf16.msra.mxu0 %v1061
    %1246 = vmatmul.bf16.gmra.mxu0 %v749
    %v1247 = vpop.f32.mrf.mxu0
    %v1248 = vadd.f32 %v1234, %v1247
    %v1249 = vpop.f32.mrf.mxu0
    %v1250 = vadd.f32 %v1236, %v1249
    %1251 = vdwg.mxu0
    %v1252 = vpack.c.bf16 %v1248, %v1192
    %v1253 = vpack.c.bf16 %v1250, %v1194
    %v1254 = vunpack.c.l.bf16 %v1252
    %v1255 = vunpack.c.h.bf16 %v1252
    %v1256 = vunpack.c.l.bf16 %v1253
    %v1257 = vunpack.c.h.bf16 %v1253
    %v1258 = vmax.f32 %v1254, 0.0
    %v1259 = vmax.f32 %v1255, 0.0
    %v1260 = vmax.f32 %v1256, 0.0
    %v1261 = vmax.f32 %v1257, 0.0
    %v1262 = vpack.c.bf16 %v1260, %v1258
    %v1263 = vpack.c.bf16 %v1261, %v1259
    %v1264 = vld [vmem:[#allocation13] sm:$0xff]
    %v1265 = vld [vmem:[#allocation13 + $0x8] sm:$0xff]
    %v1266 = vld [vmem:[#allocation13 + $0x10] sm:$0xff]
    %v1267 = vld [vmem:[#allocation13 + $0x18] sm:$0xff]
    %v1268 = vld [vmem:[#allocation13 + $0x20] sm:$0xff]
    %v1269 = vld [vmem:[#allocation13 + $0x28] sm:$0xff]
    %v1270 = vld [vmem:[#allocation13 + $0x30] sm:$0xff]
    %v1271 = vld [vmem:[#allocation13 + $0x38] sm:$0xff]
    %v1272 = vld [vmem:[#allocation13 + $0x40] sm:$0xff]
    %v1273 = vld [vmem:[#allocation13 + $0x48] sm:$0xff]
    %v1274 = vld [vmem:[#allocation13 + $0x50] sm:$0xff]
    %v1275 = vld [vmem:[#allocation13 + $0x58] sm:$0xff]
    %v1276 = vld [vmem:[#allocation13 + $0x60] sm:$0xff]
    %v1277 = vld [vmem:[#allocation13 + $0x68] sm:$0xff]
    %v1278 = vld [vmem:[#allocation13 + $0x70] sm:$0xff]
    %v1279 = vld [vmem:[#allocation13 + $0x78] sm:$0xff]
    %v1280 = vld [vmem:[#allocation13 + $0x80] sm:$0xff]
    %v1281 = vld [vmem:[#allocation13 + $0x88] sm:$0xff]
    %v1282 = vld [vmem:[#allocation13 + $0x90] sm:$0xff]
    %v1283 = vld [vmem:[#allocation13 + $0x98] sm:$0xff]
    %v1284 = vld [vmem:[#allocation13 + $0xa0] sm:$0xff]
    %v1285 = vld [vmem:[#allocation13 + $0xa8] sm:$0xff]
    %v1286 = vld [vmem:[#allocation13 + $0xb0] sm:$0xff]
    %v1287 = vld [vmem:[#allocation13 + $0xb8] sm:$0xff]
    %v1288 = vld [vmem:[#allocation13 + $0xc0] sm:$0xff]
    %v1289 = vld [vmem:[#allocation13 + $0xc8] sm:$0xff]
    %v1290 = vld [vmem:[#allocation13 + $0xd0] sm:$0xff]
    %v1291 = vld [vmem:[#allocation13 + $0xd8] sm:$0xff]
    %v1292 = vld [vmem:[#allocation13 + $0xe0] sm:$0xff]
    %v1293 = vld [vmem:[#allocation13 + $0xe8] sm:$0xff]
    %v1294 = vld [vmem:[#allocation13 + $0xf0] sm:$0xff]
    %v1295 = vld [vmem:[#allocation13 + $0xf8] sm:$0xff]
    %v1296 = vld [vmem:[%s8] sm:$0x3]
    %v1298 = vperm.slane %v1296, 0
    %v1299 = vperm.slane %v1296, 1
    %v1334 = vunpack.c.l.b16 %v1264
    %v1335 = vunpack.c.h.b16 %v1264
    %v1336 = vunpack.c.l.b16 %v1265
    %v1337 = vunpack.c.h.b16 %v1265
    %v1338 = vunpack.c.l.b16 %v1266
    %v1339 = vunpack.c.h.b16 %v1266
    %v1340 = vunpack.c.l.b16 %v1267
    %v1341 = vunpack.c.h.b16 %v1267
    %v1342 = vunpack.c.l.b16 %v1268
    %v1343 = vunpack.c.h.b16 %v1268
    %v1344 = vunpack.c.l.b16 %v1269
    %v1345 = vunpack.c.h.b16 %v1269
    %v1346 = vunpack.c.l.b16 %v1270
    %v1347 = vunpack.c.h.b16 %v1270
    %v1348 = vunpack.c.l.b16 %v1271
    %v1349 = vunpack.c.h.b16 %v1271
    %v1350 = vunpack.c.l.b16 %v1272
    %v1351 = vunpack.c.h.b16 %v1272
    %v1352 = vunpack.c.l.b16 %v1273
    %v1353 = vunpack.c.h.b16 %v1273
    %v1354 = vunpack.c.l.b16 %v1274
    %v1355 = vunpack.c.h.b16 %v1274
    %v1356 = vunpack.c.l.b16 %v1275
    %v1357 = vunpack.c.h.b16 %v1275
    %v1358 = vunpack.c.l.b16 %v1276
    %v1359 = vunpack.c.h.b16 %v1276
    %v1360 = vunpack.c.l.b16 %v1277
    %v1361 = vunpack.c.h.b16 %v1277
    %v1362 = vunpack.c.l.b16 %v1278
    %v1363 = vunpack.c.h.b16 %v1278
    %v1364 = vunpack.c.l.b16 %v1279
    %v1365 = vunpack.c.h.b16 %v1279
    %v1366 = vunpack.c.l.b16 %v1280
    %v1367 = vunpack.c.h.b16 %v1280
    %v1368 = vunpack.c.l.b16 %v1281
    %v1369 = vunpack.c.h.b16 %v1281
    %v1370 = vunpack.c.l.b16 %v1282
    %v1371 = vunpack.c.h.b16 %v1282
    %v1372 = vunpack.c.l.b16 %v1283
    %v1373 = vunpack.c.h.b16 %v1283
    %v1374 = vunpack.c.l.b16 %v1284
    %v1375 = vunpack.c.h.b16 %v1284
    %v1376 = vunpack.c.l.b16 %v1285
    %v1377 = vunpack.c.h.b16 %v1285
    %v1378 = vunpack.c.l.b16 %v1286
    %v1379 = vunpack.c.h.b16 %v1286
    %v1380 = vunpack.c.l.b16 %v1287
    %v1381 = vunpack.c.h.b16 %v1287
    %v1382 = vunpack.c.l.b16 %v1288
    %v1383 = vunpack.c.h.b16 %v1288
    %v1384 = vunpack.c.l.b16 %v1289
    %v1385 = vunpack.c.h.b16 %v1289
    %v1386 = vunpack.c.l.b16 %v1290
    %v1387 = vunpack.c.h.b16 %v1290
    %v1388 = vunpack.c.l.b16 %v1291
    %v1389 = vunpack.c.h.b16 %v1291
    %v1390 = vunpack.c.l.b16 %v1292
    %v1391 = vunpack.c.h.b16 %v1292
    %v1392 = vunpack.c.l.b16 %v1293
    %v1393 = vunpack.c.h.b16 %v1293
    %v1394 = vunpack.c.l.b16 %v1294
    %v1395 = vunpack.c.h.b16 %v1294
    %v1396 = vunpack.c.l.b16 %v1295
    %v1397 = vunpack.c.h.b16 %v1295
    %v1398 = vpack.c.b16 %v1336, %v1334
    %v1399 = vpack.c.b16 %v1337, %v1335
    %v1400 = vpack.c.b16 %v1340, %v1338
    %v1401 = vpack.c.b16 %v1341, %v1339
    %v1402 = vpack.c.b16 %v1344, %v1342
    %v1403 = vpack.c.b16 %v1345, %v1343
    %v1404 = vpack.c.b16 %v1348, %v1346
    %v1405 = vpack.c.b16 %v1349, %v1347
    %v1406 = vpack.c.b16 %v1352, %v1350
    %v1407 = vpack.c.b16 %v1353, %v1351
    %v1408 = vpack.c.b16 %v1356, %v1354
    %v1409 = vpack.c.b16 %v1357, %v1355
    %v1410 = vpack.c.b16 %v1360, %v1358
    %v1411 = vpack.c.b16 %v1361, %v1359
    %v1412 = vpack.c.b16 %v1364, %v1362
    %v1413 = vpack.c.b16 %v1365, %v1363
    %v1414 = vpack.c.b16 %v1368, %v1366
    %v1415 = vpack.c.b16 %v1369, %v1367
    %v1416 = vpack.c.b16 %v1372, %v1370
    %v1417 = vpack.c.b16 %v1373, %v1371
    %v1418 = vpack.c.b16 %v1376, %v1374
    %v1419 = vpack.c.b16 %v1377, %v1375
    %v1420 = vpack.c.b16 %v1380, %v1378
    %v1421 = vpack.c.b16 %v1381, %v1379
    %v1422 = vpack.c.b16 %v1384, %v1382
    %v1423 = vpack.c.b16 %v1385, %v1383
    %v1424 = vpack.c.b16 %v1388, %v1386
    %v1425 = vpack.c.b16 %v1389, %v1387
    %v1426 = vpack.c.b16 %v1392, %v1390
    %v1427 = vpack.c.b16 %v1393, %v1391
    %v1428 = vpack.c.b16 %v1396, %v1394
    %v1429 = vpack.c.b16 %v1397, %v1395
    %1462 = vmatpush.bf16.msra.mxu0 %v1412
    %1463 = vmatpush.bf16.msra.mxu0 %v1410
    %1464 = vmatpush.bf16.msra.mxu0 %v1408
    %1465 = vmatpush.bf16.msra.mxu0 %v1406
    %1466 = vmatpush.bf16.msra.mxu0 %v1404
    %1467 = vmatpush.bf16.msra.mxu0 %v1402
    %1468 = vmatpush.bf16.msra.mxu0 %v1400
    %1469 = vmatpush.bf16.msra.mxu0 %v1398
    %1470 = vmatmul.bf16.gmra.mxu0 %v1262
    %v1471 = vpop.f32.mrf.mxu0
    %v1472 = vadd.f32 %v1298, %v1471
    %v1473 = vpop.f32.mrf.mxu0
    %v1474 = vadd.f32 %v1298, %v1473
    %1475 = vdwg.mxu0
    %1476 = vmatpush.bf16.msra.mxu0 %v1428
    %1477 = vmatpush.bf16.msra.mxu0 %v1426
    %1478 = vmatpush.bf16.msra.mxu0 %v1424
    %1479 = vmatpush.bf16.msra.mxu0 %v1422
    %1480 = vmatpush.bf16.msra.mxu0 %v1420
    %1481 = vmatpush.bf16.msra.mxu0 %v1418
    %1482 = vmatpush.bf16.msra.mxu0 %v1416
    %1483 = vmatpush.bf16.msra.mxu0 %v1414
    %1484 = vmatmul.bf16.gmra.mxu0 %v1263
    %v1485 = vpop.f32.mrf.mxu0
    %v1486 = vadd.f32 %v1472, %v1485
    %v1487 = vpop.f32.mrf.mxu0
    %v1488 = vadd.f32 %v1474, %v1487
    %1489 = vdwg.mxu0
    %1490 = vmatpush.bf16.msra.mxu0 %v1413
    %1491 = vmatpush.bf16.msra.mxu0 %v1411
    %1492 = vmatpush.bf16.msra.mxu0 %v1409
    %1493 = vmatpush.bf16.msra.mxu0 %v1407
    %1494 = vmatpush.bf16.msra.mxu0 %v1405
    %1495 = vmatpush.bf16.msra.mxu0 %v1403
    %1496 = vmatpush.bf16.msra.mxu0 %v1401
    %1497 = vmatpush.bf16.msra.mxu0 %v1399
    %1498 = vmatmul.bf16.gmra.mxu0 %v1262
    %v1499 = vpop.f32.mrf.mxu0
    %v1500 = vadd.f32 %v1299, %v1499
    %v1501 = vpop.f32.mrf.mxu0
    %v1502 = vadd.f32 %v1299, %v1501
    %1503 = vdwg.mxu0
    %1504 = vmatpush.bf16.msra.mxu0 %v1429
    %1505 = vmatpush.bf16.msra.mxu0 %v1427
    %1506 = vmatpush.bf16.msra.mxu0 %v1425
    %1507 = vmatpush.bf16.msra.mxu0 %v1423
    %1508 = vmatpush.bf16.msra.mxu0 %v1421
    %1509 = vmatpush.bf16.msra.mxu0 %v1419
    %1510 = vmatpush.bf16.msra.mxu0 %v1417
    %1511 = vmatpush.bf16.msra.mxu0 %v1415
    %1512 = vmatmul.bf16.gmra.mxu0 %v1263
    %v1513 = vpop.f32.mrf.mxu0
    %v1514 = vadd.f32 %v1500, %v1513
    %v1515 = vpop.f32.mrf.mxu0
    %v1516 = vadd.f32 %v1502, %v1515
    %1517 = vdwg.mxu0
    %1518 = vst [vmem:[#allocation14] sm:$0xff] %v1486
    %1519 = vst [vmem:[#allocation14 + $0x8] sm:$0xff] %v1514
    %1520 = vst [vmem:[#allocation14 + $0x10] sm:$0xff] %v1488
    %1521 = vst [vmem:[#allocation14 + $0x18] sm:$0xff] %v1516
    // Predicated region
    $region66: #{tpu_custom_call.1} parent=1 // pred_check
      _
    $region67: #{tpu_custom_call.1} parent=1 // pred_check_branch
      %1523 = sbr.rel (0) target = $region69
    $region68: #{tpu_custom_call.1} parent=1 // pred_region
      %1525 = vsyncadd [#allocation4], 0
      %s1526 = sshll.u32 [#allocation14], 4
      %s1527 = int_to_ptr.vmem [resolvable:$true] %s1526
      %s1528 = sshll.u32 %s9, 4
      %s1529 = int_to_ptr.hbm [resolvable:$true] %s1528
      %1534 = dma.vmem_to_hbm [thread:$0]  %s1527, 512, %s1529, [#allocation4], 256, 256, 16
    $region69: #{tpu_custom_call.1} parent=1 // pred_fallthru
      _
    // Predicated region
    $region70: #{tpu_custom_call.1} parent=1 // pred_check
      _
    $region71: #{tpu_custom_call.1} parent=1 // pred_check_branch
      %1536 = sbr.rel (0) target = $region73
    $region72: #{tpu_custom_call.1} parent=1 // pred_region
      %1538 = dma.done [#allocation4], 512
    $region73: #{tpu_custom_call.1} parent=1 // pred_fallthru
      _
    %1539 = vsyncpa [#allocation3], 1
    %1540 = vsyncpa [#allocation6], 1
    %1541 = vsyncpa [#allocation9], 1
    %1542 = vsyncpa [#allocation12], 1
    %1543 = vsyncpa [#allocation4], 1

</llo_original>
